<compile_context>
chip_gen: v6e
topology: v6e:2x2x1
jax: 0.10.0
libtpu: 0.0.40
codegen_flags: <defaults>
</compile_context>

<pallas_src>
import functools

import numpy as np
import jax
import jax.numpy as jnp
from jax.experimental import pallas as pl
from jax.experimental.pallas import tpu as pltpu


def edge_probe_kernel(
    x1_ref,    # [R, E]           span1 rows, R = b_tile*L*S (streamed)
    x2_ref,    # [R, E]           span2 rows (streamed)
    mb1_ref,   # [b_tile, S, 1]   additive mask bias span1 (0 valid / -1e10 masked)
    mb2_ref,   # [b_tile, S, 1]
    w1_ref,    # [E, P_pad]       proj1 weight (bf16 in HBM when use_bf16)
    b1_ref,    # [1, P_pad]       proj1 bias (f32)
    w2_ref,    # [E, P_pad]
    b2_ref,    # [1, P_pad]
    sw_ref,    # [L, 1]           softmax(layer weights), precomputed in wrapper
    lw1a_ref,  # [P_pad, H]       label_net linear1, span1 half of the K axis
    lw1b_ref,  # [P_pad, H]       label_net linear1, span2 half of the K axis
    lb1_ref,   # [1, H]
    lng_ref,   # [1, H]           LayerNorm gamma
    lnb_ref,   # [1, H]           LayerNorm beta
    lw2_ref,   # [H, C_pad]       classifier weight (lane padded)
    lb2_ref,   # [1, C_pad]
    out_ref,   # [b_tile, C_pad]
    *, b_tile, num_layers, span_len, use_bf16,
):
    P = w1_ref.shape[1]

    def project_and_pool(x_ref, w_ref, b_ref, mb_ref):
        x = x_ref[...]
        if use_bf16:
            x = x.astype(jnp.bfloat16)          # weights already bf16 in HBM
        proj = jnp.dot(x, w_ref[...], preferred_element_type=jnp.float32)  # [R,P] f32
        proj = proj + b_ref[...]
        proj = proj.reshape(b_tile, num_layers, span_len, P)
        # MaxSpanRepr via additive mask bias: equivalent to spans*m - 1e10*(1-m)
        # whenever each span has >=1 valid token.  mb is per-(b,s); broadcast
        # over layers and lanes in-VPU (kept in f32).
        proj = proj + mb_ref[...][:, None, :, :]
        return jnp.max(proj, axis=2)            # [b_tile, L, P]

    pooled1 = project_and_pool(x1_ref, w1_ref, b1_ref, mb1_ref)
    pooled2 = project_and_pool(x2_ref, w2_ref, b2_ref, mb2_ref)

    # softmax-weighted sum over layers (weights precomputed in wrapper)
    sw = sw_ref[...].reshape(1, num_layers, 1)
    f1 = jnp.sum(pooled1 * sw, axis=1)          # [b_tile, P]
    f2 = jnp.sum(pooled2 * sw, axis=1)          # [b_tile, P]

    # --- label_net: Linear -> Tanh -> LayerNorm -> (Dropout=id) -> Linear -> Sigmoid
    # concat(f1, f2) @ lw1  ==  f1 @ lw1[:P] + f2 @ lw1[P:]  (no in-kernel concat)
    if use_bf16:
        f1 = f1.astype(jnp.bfloat16)
        f2 = f2.astype(jnp.bfloat16)
    h = (jnp.dot(f1, lw1a_ref[...], preferred_element_type=jnp.float32)
         + jnp.dot(f2, lw1b_ref[...], preferred_element_type=jnp.float32)
         + lb1_ref[...])
    h = jnp.tanh(h)
    mean = jnp.mean(h, axis=-1, keepdims=True)
    var = jnp.mean(jnp.square(h - mean), axis=-1, keepdims=True)
    h = (h - mean) * jax.lax.rsqrt(var + 1e-5)
    h = h * lng_ref[...] + lnb_ref[...]
    # TODO(synk): nn.Dropout(0.3) is identity at inference; stochastic training
    # dropout (pltpu.prng_seed/prng_random_bits) not implemented.

    if use_bf16:
        h = h.astype(jnp.bfloat16)
    logits = jnp.dot(h, lw2_ref[...], preferred_element_type=jnp.float32) + lb2_ref[...]
    out_ref[...] = jax.nn.sigmoid(logits)       # lane-dense [b_tile, C_pad]


def _round_up(x, m):
    return ((x + m - 1) // m) * m


def _tpu_generation_defaults():
    """Per-generation (b_tile, vmem_limit_bytes, use_bf16) defaults.

    v7x: 64 MiB physical VMEM/TC -> keep tile small, 48 MiB scoped limit.
    v6e: 128 MiB VMEM -> larger tile, 96 MiB limit.
    v5e: 128 MiB VMEM, low HBM BW + small MXU -> larger tile + bf16 MXU path.
    Unknown / other: conservative (32 MiB scoped default, b_tile=8).
    """
    try:
        kind = jax.devices()[0].device_kind.lower()
    except Exception:
        kind = ""
    if "v7" in kind:
        return 8, 48 * 1024 * 1024, False
    if "v6" in kind:
        return 16, 96 * 1024 * 1024, False
    if "v5e" in kind or "v5 lite" in kind or "v5lite" in kind:
        return 16, 96 * 1024 * 1024, True
    return 8, 32 * 1024 * 1024, False


def edge_probe_forward(span1, mask1, span2, mask2, params, *,
                       b_tile=None, use_bf16=None, vmem_limit_bytes=None):
    B, L, S, E = span1.shape
    P = params["w1"].shape[1]
    H = params["lw1"].shape[1]
    C = params["lw2"].shape[1]
    f32 = jnp.float32

    d_tile, d_vmem, d_bf16 = _tpu_generation_defaults()
    if b_tile is None:
        b_tile = d_tile
    if vmem_limit_bytes is None:
        vmem_limit_bytes = d_vmem
    if use_bf16 is None:
        use_bf16 = d_bf16
    # b_tile must be a multiple of 8: it is the sublane dim of the output block
    # and a factor of R = b_tile*L*S (sublane dim of the streamed row blocks).
    assert b_tile % 8 == 0, "b_tile must be a multiple of 8 (sublane alignment)"

    P_pad = _round_up(P, 128)          # lane-dense projection / pooling tiles
    C_pad = _round_up(max(C, 1), 128)  # lane-dense output -> unmasked stores
    w_dtype = jnp.bfloat16 if use_bf16 else f32

    # ---- parameter-only prep, done once in XLA ----
    soft_w = jax.nn.softmax(params["layer_w"].reshape(-1).astype(f32)).reshape(L, 1)

    def pad_proj_w(w):  # [E, P] -> [E, P_pad], stored in matmul dtype
        return jnp.zeros((w.shape[0], P_pad), f32).at[:, :P].set(w).astype(w_dtype)

    w1p = pad_proj_w(params["w1"])
    w2p = pad_proj_w(params["w2"])
    b1p = jnp.zeros((1, P_pad), f32).at[:, :P].set(params["b1"].reshape(1, P))
    b2p = jnp.zeros((1, P_pad), f32).at[:, :P].set(params["b2"].reshape(1, P))

    lw1 = params["lw1"]  # [2P, H], split into the two span halves of the K axis
    lw1a = jnp.zeros((P_pad, H), f32).at[:P, :].set(lw1[:P, :]).astype(w_dtype)
    lw1b = jnp.zeros((P_pad, H), f32).at[:P, :].set(lw1[P:, :]).astype(w_dtype)
    lb1 = params["lb1"].reshape(1, H).astype(f32)
    lng = params["ln_g"].reshape(1, H).astype(f32)
    lnb = params["ln_b"].reshape(1, H).astype(f32)
    lw2p = jnp.zeros((H, C_pad), f32).at[:, :C].set(params["lw2"]).astype(w_dtype)
    lb2p = jnp.zeros((1, C_pad), f32).at[:, :C].set(params["lb2"].reshape(1, C))

    # ---- activation prep: per-(b,s) mask bias scalars (no [B,S,2P] blow-up) ----
    mb1 = (-1.0e10 * (1.0 - mask1.astype(f32)))[:, :, None]   # [B, S, 1]
    mb2 = (-1.0e10 * (1.0 - mask2.astype(f32)))[:, :, None]

    n_tiles = pl.cdiv(B, b_tile)
    B_pad = n_tiles * b_tile
    if B_pad != B:
        pad4 = ((0, B_pad - B), (0, 0), (0, 0), (0, 0))
        pad3 = ((0, B_pad - B), (0, 0), (0, 0))
        span1 = jnp.pad(span1, pad4)
        span2 = jnp.pad(span2, pad4)
        mb1 = jnp.pad(mb1, pad3)
        mb2 = jnp.pad(mb2, pad3)

    # Flatten (batch, layer, span) rows: contiguous reshape, no extra HBM copy,
    # and no feature-axis concat of the big activation tensors.
    x1_rows = span1.reshape(B_pad * L * S, E)
    x2_rows = span2.reshape(B_pad * L * S, E)
    R = b_tile * L * S                          # rows per grid step (per span)

    kernel = functools.partial(
        edge_probe_kernel,
        b_tile=b_tile, num_layers=L, span_len=S, use_bf16=use_bf16)

    def const(shape):  # parameter blocks: constant block index -> VMEM-resident
        return pl.BlockSpec(shape, lambda i: (0,) * len(shape))

    out = pl.pallas_call(
        kernel,
        out_shape=jax.ShapeDtypeStruct((B_pad, C_pad), f32),
        grid=(n_tiles,),
        in_specs=[
            pl.BlockSpec((R, E), lambda i: (i, 0)),             # span1 rows (streamed)
            pl.BlockSpec((R, E), lambda i: (i, 0)),             # span2 rows (streamed)
            pl.BlockSpec((b_tile, S, 1), lambda i: (i, 0, 0)),  # mask bias span1
            pl.BlockSpec((b_tile, S, 1), lambda i: (i, 0, 0)),  # mask bias span2
            const((E, P_pad)), const((1, P_pad)),               # proj1 w/b
            const((E, P_pad)), const((1, P_pad)),               # proj2 w/b
            const((L, 1)),                                      # softmax(layer weights)
            const((P_pad, H)), const((P_pad, H)),               # label_net linear1 halves
            const((1, H)),                                      # lb1
            const((1, H)), const((1, H)),                       # LayerNorm gamma/beta
            const((H, C_pad)), const((1, C_pad)),               # classifier (padded)
        ],
        out_specs=pl.BlockSpec((b_tile, C_pad), lambda i: (i, 0)),
        compiler_params=pltpu.CompilerParams(
            dimension_semantics=("parallel",),   # megacore-shards batch tiles
            vmem_limit_bytes=vmem_limit_bytes,   # generation-aware (see defaults)
        ),
    )(x1_rows, x2_rows, mb1, mb2,
      w1p, b1p, w2p, b2p, soft_w,
      lw1a, lw1b, lb1, lng, lnb, lw2p, lb2p)

    out = out[:B, :C]
    if C == 1:
        out = out[:, 0]   # torch.squeeze(pred_label, dim=-1)
    return out


def edge_probe_reference(span1, mask1, span2, mask2, params):
    """Pure-JAX reference mirroring the PyTorch forward (eval mode)."""
    def pool(span, mask, w, b):
        proj = jnp.einsum("blse,ep->blsp", span, w) + b.reshape(-1)
        m = mask[:, None, :, None]
        masked = proj * m - 1.0e10 * (1.0 - m)
        return jnp.max(masked, axis=2)

    p1 = pool(span1, mask1, params["w1"], params["b1"])
    p2 = pool(span2, mask2, params["w2"], params["b2"])
    out = jnp.concatenate([p1, p2], axis=-1)                   # [B, L, 2P]
    sw = jax.nn.softmax(params["layer_w"].reshape(-1))
    wtd = jnp.einsum("l,blp->bp", sw, out)
    h = wtd @ params["lw1"] + params["lb1"].reshape(-1)
    h = jnp.tanh(h)
    mean = jnp.mean(h, axis=-1, keepdims=True)
    var = jnp.mean((h - mean) ** 2, axis=-1, keepdims=True)
    h = (h - mean) / jnp.sqrt(var + 1e-5)
    h = h * params["ln_g"].reshape(-1) + params["ln_b"].reshape(-1)
    logits = h @ params["lw2"] + params["lb2"].reshape(-1)
    return jax.nn.sigmoid(logits)


if __name__ == "__main__":
    # Small shapes consistent with the module's forward:
    B, L, S, E = 2, 4, 8, 32        # batch, num_layers, input_span_len, embedding_dim
    P, H, C = 32, 32, 3             # proj_dim, hidden_dim, num_classes

    key = jax.random.PRNGKey(0)
    ks = jax.random.split(key, 12)

    span1 = jax.random.normal(ks[0], (B, L, S, E), jnp.float32)
    span2 = jax.random.normal(ks[1], (B, L, S, E), jnp.float32)
    # Binary attention masks (float), first token always valid.
    mask1 = (jax.random.uniform(ks[2], (B, S)) > 0.3).astype(jnp.float32).at[:, 0].set(1.0)
    mask2 = (jax.random.uniform(ks[3], (B, S)) > 0.3).astype(jnp.float32).at[:, 0].set(1.0)

    def lin_init(k, fan_in, shape):
        bound = 1.0 / np.sqrt(fan_in)
        return jax.random.uniform(k, shape, jnp.float32, -bound, bound)

    params = {
        "w1": lin_init(ks[4], E, (E, P)),
        "b1": lin_init(ks[5], E, (1, P)),
        "w2": lin_init(ks[6], E, (E, P)),
        "b2": lin_init(ks[7], E, (1, P)),
        "layer_w": jnp.ones((1, L), jnp.float32),      # nn.Parameter(torch.ones(num_layers))
        "lw1": lin_init(ks[8], 2 * P, (2 * P, H)),
        "lb1": lin_init(ks[9], 2 * P, (1, H)),
        "ln_g": jnp.ones((1, H), jnp.float32),
        "ln_b": jnp.zeros((1, H), jnp.float32),
        "lw2": lin_init(ks[10], H, (H, C)),
        "lb2": lin_init(ks[11], H, (1, C)),
    }

    ref = jax.block_until_ready(edge_probe_reference(span1, mask1, span2, mask2, params))

    # f32 path: must match the reference tightly (explicit use_bf16=False so the
    # per-generation bf16 default on v5e does not loosen this check).
    out = jax.block_until_ready(
        edge_probe_forward(span1, mask1, span2, mask2, params, use_bf16=False))
    np.testing.assert_allclose(np.asarray(out), np.asarray(ref), rtol=1e-5, atol=2e-5)

    # bf16-MXU path (bf16 weights in HBM, f32 accumulation): looser tolerance
    # on sigmoid outputs.
    out_bf16 = jax.block_until_ready(
        edge_probe_forward(span1, mask1, span2, mask2, params, use_bf16=True))
    np.testing.assert_allclose(np.asarray(out_bf16), np.asarray(ref), rtol=0, atol=1e-1)

    print("KERNEL_OK")
</pallas_src>

<mosaic_0001>
module attributes {stable_mosaic.version = 11 : i64} {
  func.func @edge_probe_kernel(%arg0: i32, %arg1: memref<256x32xf32, #tpu.memory_space<vmem>>, %arg2: memref<256x32xf32, #tpu.memory_space<vmem>>, %arg3: memref<8x8x1xf32, #tpu.memory_space<vmem>>, %arg4: memref<8x8x1xf32, #tpu.memory_space<vmem>>, %arg5: memref<32x128xf32, #tpu.memory_space<vmem>>, %arg6: memref<1x128xf32, #tpu.memory_space<vmem>>, %arg7: memref<32x128xf32, #tpu.memory_space<vmem>>, %arg8: memref<1x128xf32, #tpu.memory_space<vmem>>, %arg9: memref<4x1xf32, #tpu.memory_space<vmem>>, %arg10: memref<128x32xf32, #tpu.memory_space<vmem>>, %arg11: memref<128x32xf32, #tpu.memory_space<vmem>>, %arg12: memref<1x32xf32, #tpu.memory_space<vmem>>, %arg13: memref<1x32xf32, #tpu.memory_space<vmem>>, %arg14: memref<1x32xf32, #tpu.memory_space<vmem>>, %arg15: memref<32x128xf32, #tpu.memory_space<vmem>>, %arg16: memref<1x128xf32, #tpu.memory_space<vmem>>, %arg17: memref<8x128xf32, #tpu.memory_space<vmem>>) attributes {dimension_semantics = [#tpu.dimension_semantics<parallel>], iteration_bounds = array<i64: 1>, scalar_prefetch = 0 : i64, scratch_operands = 0 : i64, tpu.core_type = #tpu.core_type<tc>, window_params = [{transform_indices = @transform_0, window_bounds = array<i64: 256, 32>}, {transform_indices = @transform_1, window_bounds = array<i64: 256, 32>}, {transform_indices = @transform_2, window_bounds = array<i64: 8, 8, 1>}, {transform_indices = @transform_3, window_bounds = array<i64: 8, 8, 1>}, {pipeline_mode = #tpu.pipeline_mode<synchronous>, transform_indices = @transform_4, window_bounds = array<i64: 32, 128>}, {pipeline_mode = #tpu.pipeline_mode<synchronous>, transform_indices = @transform_5, window_bounds = array<i64: 1, 128>}, {pipeline_mode = #tpu.pipeline_mode<synchronous>, transform_indices = @transform_6, window_bounds = array<i64: 32, 128>}, {pipeline_mode = #tpu.pipeline_mode<synchronous>, transform_indices = @transform_7, window_bounds = array<i64: 1, 128>}, {pipeline_mode = #tpu.pipeline_mode<synchronous>, transform_indices = @transform_8, window_bounds = array<i64: 4, 1>}, {pipeline_mode = #tpu.pipeline_mode<synchronous>, transform_indices = @transform_9, window_bounds = array<i64: 128, 32>}, {pipeline_mode = #tpu.pipeline_mode<synchronous>, transform_indices = @transform_10, window_bounds = array<i64: 128, 32>}, {pipeline_mode = #tpu.pipeline_mode<synchronous>, transform_indices = @transform_11, window_bounds = array<i64: 1, 32>}, {pipeline_mode = #tpu.pipeline_mode<synchronous>, transform_indices = @transform_12, window_bounds = array<i64: 1, 32>}, {pipeline_mode = #tpu.pipeline_mode<synchronous>, transform_indices = @transform_13, window_bounds = array<i64: 1, 32>}, {pipeline_mode = #tpu.pipeline_mode<synchronous>, transform_indices = @transform_14, window_bounds = array<i64: 32, 128>}, {pipeline_mode = #tpu.pipeline_mode<synchronous>, transform_indices = @transform_15, window_bounds = array<i64: 1, 128>}, {transform_indices = @transform_16, window_bounds = array<i64: 8, 128>}]} {
    %c0 = arith.constant 0 : index
    %c0_0 = arith.constant 0 : index
    %0 = vector.load %arg1[%c0, %c0_0] : memref<256x32xf32, #tpu.memory_space<vmem>>, vector<256x32xf32>
    %c0_1 = arith.constant 0 : index
    %c0_2 = arith.constant 0 : index
    %1 = vector.load %arg5[%c0_1, %c0_2] : memref<32x128xf32, #tpu.memory_space<vmem>>, vector<32x128xf32>
    %cst = arith.constant dense<0.000000e+00> : vector<256x128xf32>
    %2 = tpu.matmul %0, %1, %cst {dimension_numbers = #tpu.dot_dimension_numbers<[1], [0], [0], [1], [0, 0, 1, 1], [], []>} : vector<256x32xf32>, vector<32x128xf32>, vector<256x128xf32> -> vector<256x128xf32>
    %c0_3 = arith.constant 0 : index
    %c0_4 = arith.constant 0 : index
    %3 = vector.load %arg6[%c0_3, %c0_4] : memref<1x128xf32, #tpu.memory_space<vmem>>, vector<1x128xf32>
    %4 = vector.broadcast %3 : vector<1x128xf32> to vector<256x128xf32>
    %5 = arith.addf %2, %4 : vector<256x128xf32>
    %6 = vector.shape_cast %5 : vector<256x128xf32> to vector<8x4x8x128xf32>
    %c0_5 = arith.constant 0 : index
    %c0_6 = arith.constant 0 : index
    %c0_7 = arith.constant 0 : index
    %7 = vector.load %arg3[%c0_5, %c0_6, %c0_7] : memref<8x8x1xf32, #tpu.memory_space<vmem>>, vector<8x8x1xf32>
    %8 = vector.shape_cast %7 : vector<8x8x1xf32> to vector<8x1x8x1xf32>
    %9 = vector.broadcast %8 : vector<8x1x8x1xf32> to vector<8x4x8x128xf32>
    %10 = arith.addf %6, %9 : vector<8x4x8x128xf32>
    %cst_8 = arith.constant dense<0xFF800000> : vector<8x4x128xf32>
    %11 = vector.multi_reduction <maximumf>, %10, %cst_8 [2] : vector<8x4x8x128xf32> to vector<8x4x128xf32>
    %c0_9 = arith.constant 0 : index
    %c0_10 = arith.constant 0 : index
    %12 = vector.load %arg2[%c0_9, %c0_10] : memref<256x32xf32, #tpu.memory_space<vmem>>, vector<256x32xf32>
    %c0_11 = arith.constant 0 : index
    %c0_12 = arith.constant 0 : index
    %13 = vector.load %arg7[%c0_11, %c0_12] : memref<32x128xf32, #tpu.memory_space<vmem>>, vector<32x128xf32>
    %cst_13 = arith.constant dense<0.000000e+00> : vector<256x128xf32>
    %14 = tpu.matmul %12, %13, %cst_13 {dimension_numbers = #tpu.dot_dimension_numbers<[1], [0], [0], [1], [0, 0, 1, 1], [], []>} : vector<256x32xf32>, vector<32x128xf32>, vector<256x128xf32> -> vector<256x128xf32>
    %c0_14 = arith.constant 0 : index
    %c0_15 = arith.constant 0 : index
    %15 = vector.load %arg8[%c0_14, %c0_15] : memref<1x128xf32, #tpu.memory_space<vmem>>, vector<1x128xf32>
    %16 = vector.broadcast %15 : vector<1x128xf32> to vector<256x128xf32>
    %17 = arith.addf %14, %16 : vector<256x128xf32>
    %18 = vector.shape_cast %17 : vector<256x128xf32> to vector<8x4x8x128xf32>
    %c0_16 = arith.constant 0 : index
    %c0_17 = arith.constant 0 : index
    %c0_18 = arith.constant 0 : index
    %19 = vector.load %arg4[%c0_16, %c0_17, %c0_18] : memref<8x8x1xf32, #tpu.memory_space<vmem>>, vector<8x8x1xf32>
    %20 = vector.shape_cast %19 : vector<8x8x1xf32> to vector<8x1x8x1xf32>
    %21 = vector.broadcast %20 : vector<8x1x8x1xf32> to vector<8x4x8x128xf32>
    %22 = arith.addf %18, %21 : vector<8x4x8x128xf32>
    %cst_19 = arith.constant dense<0xFF800000> : vector<8x4x128xf32>
    %23 = vector.multi_reduction <maximumf>, %22, %cst_19 [2] : vector<8x4x8x128xf32> to vector<8x4x128xf32>
    %c0_20 = arith.constant 0 : index
    %c0_21 = arith.constant 0 : index
    %24 = vector.load %arg9[%c0_20, %c0_21] : memref<4x1xf32, #tpu.memory_space<vmem>>, vector<4x1xf32>
    %25 = vector.shape_cast %24 : vector<4x1xf32> to vector<1x4x1xf32>
    %26 = vector.broadcast %25 : vector<1x4x1xf32> to vector<8x4x128xf32>
    %27 = arith.mulf %11, %26 : vector<8x4x128xf32>
    %cst_22 = arith.constant dense<0.000000e+00> : vector<8x128xf32>
    %28 = vector.multi_reduction <add>, %27, %cst_22 [1] : vector<8x4x128xf32> to vector<8x128xf32>
    %29 = vector.broadcast %25 : vector<1x4x1xf32> to vector<8x4x128xf32>
    %30 = arith.mulf %23, %29 : vector<8x4x128xf32>
    %cst_23 = arith.constant dense<0.000000e+00> : vector<8x128xf32>
    %31 = vector.multi_reduction <add>, %30, %cst_23 [1] : vector<8x4x128xf32> to vector<8x128xf32>
    %c0_24 = arith.constant 0 : index
    %c0_25 = arith.constant 0 : index
    %32 = vector.load %arg10[%c0_24, %c0_25] : memref<128x32xf32, #tpu.memory_space<vmem>>, vector<128x32xf32>
    %cst_26 = arith.constant dense<0.000000e+00> : vector<8x32xf32>
    %33 = tpu.matmul %28, %32, %cst_26 {dimension_numbers = #tpu.dot_dimension_numbers<[1], [0], [0], [1], [0, 0, 1, 1], [], []>} : vector<8x128xf32>, vector<128x32xf32>, vector<8x32xf32> -> vector<8x32xf32>
    %c0_27 = arith.constant 0 : index
    %c0_28 = arith.constant 0 : index
    %34 = vector.load %arg11[%c0_27, %c0_28] : memref<128x32xf32, #tpu.memory_space<vmem>>, vector<128x32xf32>
    %cst_29 = arith.constant dense<0.000000e+00> : vector<8x32xf32>
    %35 = tpu.matmul %31, %34, %cst_29 {dimension_numbers = #tpu.dot_dimension_numbers<[1], [0], [0], [1], [0, 0, 1, 1], [], []>} : vector<8x128xf32>, vector<128x32xf32>, vector<8x32xf32> -> vector<8x32xf32>
    %36 = arith.addf %33, %35 : vector<8x32xf32>
    %c0_30 = arith.constant 0 : index
    %c0_31 = arith.constant 0 : index
    %37 = vector.load %arg12[%c0_30, %c0_31] : memref<1x32xf32, #tpu.memory_space<vmem>>, vector<1x32xf32>
    %38 = vector.broadcast %37 : vector<1x32xf32> to vector<8x32xf32>
    %39 = arith.addf %36, %38 : vector<8x32xf32>
    %40 = math.tanh %39 : vector<8x32xf32>
    %cst_32 = arith.constant dense<0.000000e+00> : vector<8xf32>
    %41 = vector.multi_reduction <add>, %40, %cst_32 [1] : vector<8x32xf32> to vector<8xf32>
    %42 = vector.shape_cast %41 : vector<8xf32> to vector<8x1xf32>
    %cst_33 = arith.constant 3.200000e+01 : f32
    %43 = vector.broadcast %cst_33 : f32 to vector<8x1xf32>
    %44 = arith.divf %42, %43 : vector<8x1xf32>
    %45 = vector.broadcast %44 : vector<8x1xf32> to vector<8x32xf32>
    %46 = arith.subf %40, %45 : vector<8x32xf32>
    %47 = arith.mulf %46, %46 : vector<8x32xf32>
    %cst_34 = arith.constant dense<0.000000e+00> : vector<8xf32>
    %48 = vector.multi_reduction <add>, %47, %cst_34 [1] : vector<8x32xf32> to vector<8xf32>
    %49 = vector.shape_cast %48 : vector<8xf32> to vector<8x1xf32>
    %cst_35 = arith.constant 3.200000e+01 : f32
    %50 = vector.broadcast %cst_35 : f32 to vector<8x1xf32>
    %51 = arith.divf %49, %50 : vector<8x1xf32>
    %52 = vector.broadcast %44 : vector<8x1xf32> to vector<8x32xf32>
    %53 = arith.subf %40, %52 : vector<8x32xf32>
    %cst_36 = arith.constant 9.99999974E-6 : f32
    %54 = vector.broadcast %cst_36 : f32 to vector<8x1xf32>
    %55 = arith.addf %51, %54 : vector<8x1xf32>
    %56 = math.rsqrt %55 : vector<8x1xf32>
    %57 = vector.broadcast %56 : vector<8x1xf32> to vector<8x32xf32>
    %58 = arith.mulf %53, %57 : vector<8x32xf32>
    %c0_37 = arith.constant 0 : index
    %c0_38 = arith.constant 0 : index
    %59 = vector.load %arg13[%c0_37, %c0_38] : memref<1x32xf32, #tpu.memory_space<vmem>>, vector<1x32xf32>
    %60 = vector.broadcast %59 : vector<1x32xf32> to vector<8x32xf32>
    %61 = arith.mulf %58, %60 : vector<8x32xf32>
    %c0_39 = arith.constant 0 : index
    %c0_40 = arith.constant 0 : index
    %62 = vector.load %arg14[%c0_39, %c0_40] : memref<1x32xf32, #tpu.memory_space<vmem>>, vector<1x32xf32>
    %63 = vector.broadcast %62 : vector<1x32xf32> to vector<8x32xf32>
    %64 = arith.addf %61, %63 : vector<8x32xf32>
    %c0_41 = arith.constant 0 : index
    %c0_42 = arith.constant 0 : index
    %65 = vector.load %arg15[%c0_41, %c0_42] : memref<32x128xf32, #tpu.memory_space<vmem>>, vector<32x128xf32>
    %cst_43 = arith.constant dense<0.000000e+00> : vector<8x128xf32>
    %66 = tpu.matmul %64, %65, %cst_43 {dimension_numbers = #tpu.dot_dimension_numbers<[1], [0], [0], [1], [0, 0, 1, 1], [], []>} : vector<8x32xf32>, vector<32x128xf32>, vector<8x128xf32> -> vector<8x128xf32>
    %c0_44 = arith.constant 0 : index
    %c0_45 = arith.constant 0 : index
    %67 = vector.load %arg16[%c0_44, %c0_45] : memref<1x128xf32, #tpu.memory_space<vmem>>, vector<1x128xf32>
    %68 = vector.broadcast %67 : vector<1x128xf32> to vector<8x128xf32>
    %69 = arith.addf %66, %68 : vector<8x128xf32>
    %70 = arith.negf %69 : vector<8x128xf32>
    %71 = math.exp %70 : vector<8x128xf32>
    %cst_46 = arith.constant 1.000000e+00 : f32
    %72 = vector.broadcast %cst_46 : f32 to vector<8x128xf32>
    %73 = arith.addf %72, %71 : vector<8x128xf32>
    %74 = arith.divf %72, %73 : vector<8x128xf32>
    %c0_47 = arith.constant 0 : index
    %c0_48 = arith.constant 0 : index
    %75 = vector.load %arg17[%c0_47, %c0_48] : memref<8x128xf32, #tpu.memory_space<vmem>>, vector<8x128xf32>
    tpu.vector_store %arg17[%c0_47, %c0_48], %74 {strides = array<i32>} : memref<8x128xf32, #tpu.memory_space<vmem>>, vector<8x128xf32>,
    return
  }
  func.func @transform_0(%arg0: i32) -> (i32, i32) {
    %c0_i32 = arith.constant 0 : i32
    %c0_i32_0 = arith.constant 0 : i32
    return %arg0, %c0_i32 : i32, i32
  }
  func.func @transform_1(%arg0: i32) -> (i32, i32) {
    %c0_i32 = arith.constant 0 : i32
    %c0_i32_0 = arith.constant 0 : i32
    return %arg0, %c0_i32 : i32, i32
  }
  func.func @transform_2(%arg0: i32) -> (i32, i32, i32) {
    %c0_i32 = arith.constant 0 : i32
    %c0_i32_0 = arith.constant 0 : i32
    %c0_i32_1 = arith.constant 0 : i32
    return %arg0, %c0_i32, %c0_i32_0 : i32, i32, i32
  }
  func.func @transform_3(%arg0: i32) -> (i32, i32, i32) {
    %c0_i32 = arith.constant 0 : i32
    %c0_i32_0 = arith.constant 0 : i32
    %c0_i32_1 = arith.constant 0 : i32
    return %arg0, %c0_i32, %c0_i32_0 : i32, i32, i32
  }
  func.func @transform_4(%arg0: i32) -> (i32, i32) {
    %c0_i32 = arith.constant 0 : i32
    %c0_i32_0 = arith.constant 0 : i32
    %c0_i32_1 = arith.constant 0 : i32
    return %c0_i32, %c0_i32_0 : i32, i32
  }
  func.func @transform_5(%arg0: i32) -> (i32, i32) {
    %c0_i32 = arith.constant 0 : i32
    %c0_i32_0 = arith.constant 0 : i32
    %c0_i32_1 = arith.constant 0 : i32
    return %c0_i32, %c0_i32_0 : i32, i32
  }
  func.func @transform_6(%arg0: i32) -> (i32, i32) {
    %c0_i32 = arith.constant 0 : i32
    %c0_i32_0 = arith.constant 0 : i32
    %c0_i32_1 = arith.constant 0 : i32
    return %c0_i32, %c0_i32_0 : i32, i32
  }
  func.func @transform_7(%arg0: i32) -> (i32, i32) {
    %c0_i32 = arith.constant 0 : i32
    %c0_i32_0 = arith.constant 0 : i32
    %c0_i32_1 = arith.constant 0 : i32
    return %c0_i32, %c0_i32_0 : i32, i32
  }
  func.func @transform_8(%arg0: i32) -> (i32, i32) {
    %c0_i32 = arith.constant 0 : i32
    %c0_i32_0 = arith.constant 0 : i32
    %c0_i32_1 = arith.constant 0 : i32
    return %c0_i32, %c0_i32_0 : i32, i32
  }
  func.func @transform_9(%arg0: i32) -> (i32, i32) {
    %c0_i32 = arith.constant 0 : i32
    %c0_i32_0 = arith.constant 0 : i32
    %c0_i32_1 = arith.constant 0 : i32
    return %c0_i32, %c0_i32_0 : i32, i32
  }
  func.func @transform_10(%arg0: i32) -> (i32, i32) {
    %c0_i32 = arith.constant 0 : i32
    %c0_i32_0 = arith.constant 0 : i32
    %c0_i32_1 = arith.constant 0 : i32
    return %c0_i32, %c0_i32_0 : i32, i32
  }
  func.func @transform_11(%arg0: i32) -> (i32, i32) {
    %c0_i32 = arith.constant 0 : i32
    %c0_i32_0 = arith.constant 0 : i32
    %c0_i32_1 = arith.constant 0 : i32
    return %c0_i32, %c0_i32_0 : i32, i32
  }
  func.func @transform_12(%arg0: i32) -> (i32, i32) {
    %c0_i32 = arith.constant 0 : i32
    %c0_i32_0 = arith.constant 0 : i32
    %c0_i32_1 = arith.constant 0 : i32
    return %c0_i32, %c0_i32_0 : i32, i32
  }
  func.func @transform_13(%arg0: i32) -> (i32, i32) {
    %c0_i32 = arith.constant 0 : i32
    %c0_i32_0 = arith.constant 0 : i32
    %c0_i32_1 = arith.constant 0 : i32
    return %c0_i32, %c0_i32_0 : i32, i32
  }
  func.func @transform_14(%arg0: i32) -> (i32, i32) {
    %c0_i32 = arith.constant 0 : i32
    %c0_i32_0 = arith.constant 0 : i32
    %c0_i32_1 = arith.constant 0 : i32
    return %c0_i32, %c0_i32_0 : i32, i32
  }
  func.func @transform_15(%arg0: i32) -> (i32, i32) {
    %c0_i32 = arith.constant 0 : i32
    %c0_i32_0 = arith.constant 0 : i32
    %c0_i32_1 = arith.constant 0 : i32
    return %c0_i32, %c0_i32_0 : i32, i32
  }
  func.func @transform_16(%arg0: i32) -> (i32, i32) {
    %c0_i32 = arith.constant 0 : i32
    %c0_i32_0 = arith.constant 0 : i32
    return %arg0, %c0_i32 : i32, i32
  }
}

</mosaic_0001>

<llo_original>
// kernel: tpu_custom_call.1
$region0: #{tpu_custom_call.1}
  #allocation0 [shape = 'u32[]', space=smem, size = 0x4, offset = 0x4, fixed_abs, tag = 'smem constant byte address 0x4 - core index']
  #allocation1 [shape = 'u32[144,128]{1,0:T(1,128)}', space=vmem, size = 0x12000, scoped, tag = 'internal scratch']
  %s0 = inlined_call_operand.vmem [shape: f32[256,32], index: 0, kind: input, shape index: {}]
  %s1 = inlined_call_operand.vmem [shape: f32[256,32], index: 1, kind: input, shape index: {}]
  %s2 = inlined_call_operand.vmem [shape: f32[8,8,1], index: 2, kind: input, shape index: {}]
  %s3 = inlined_call_operand.vmem [shape: f32[8,8,1], index: 3, kind: input, shape index: {}]
  %s4 = inlined_call_operand.vmem [shape: f32[32,128], index: 4, kind: input, shape index: {}]
  %s5 = inlined_call_operand.vmem [shape: f32[1,128], index: 5, kind: input, shape index: {}]
  %s6 = inlined_call_operand.vmem [shape: f32[32,128], index: 6, kind: input, shape index: {}]
  %s7 = inlined_call_operand.vmem [shape: f32[1,128], index: 7, kind: input, shape index: {}]
  %s8 = inlined_call_operand.vmem [shape: f32[4,1], index: 8, kind: input, shape index: {}]
  %s9 = inlined_call_operand.vmem [shape: f32[128,32], index: 9, kind: input, shape index: {}]
  %s10 = inlined_call_operand.vmem [shape: f32[128,32], index: 10, kind: input, shape index: {}]
  %s11 = inlined_call_operand.vmem [shape: f32[1,32], index: 11, kind: input, shape index: {}]
  %s12 = inlined_call_operand.vmem [shape: f32[1,32], index: 12, kind: input, shape index: {}]
  %s13 = inlined_call_operand.vmem [shape: f32[1,32], index: 13, kind: input, shape index: {}]
  %s14 = inlined_call_operand.vmem [shape: f32[32,128], index: 14, kind: input, shape index: {}]
  %s15 = inlined_call_operand.vmem [shape: f32[1,128], index: 15, kind: input, shape index: {}]
  %s16 = inlined_call_operand.hbm [shape: f32[8,128], index: 16, kind: output, shape index: {}]
  %s17 = sld [smem:[#allocation0]]
  $region74: #{tpu_custom_call.1} parent=0
    _
  %s19 = ssub.s32 1, %s17
  %s20 = scalar_select 0, %s19, %s17
  $region1: #{tpu_custom_call.1} parent=0
    #allocation2 [shape = 'u8[4096]{0}', space=vmem, size = 0x1000, scoped, tag = 'output window, operand 0, single buffered']
    #allocation3 [shape = 's32[1]{0}', space=sflag, size = 0x4, scoped, tag = 'scoped memory for tpu_custom_call.1']
    %21 = vsyncpa [#allocation3], 0
    // Predicated region
    $region2: #{tpu_custom_call.1} parent=1 // pred_check
      _
    $region3: #{tpu_custom_call.1} parent=1 // pred_check_branch
      %23 = sbr.rel (0) target = $region5
    $region4: #{tpu_custom_call.1} parent=1 // pred_region
      _
    $region5: #{tpu_custom_call.1} parent=1 // pred_fallthru
      _
    // Predicated region
    $region6: #{tpu_custom_call.1} parent=1 // pred_check
      _
    $region7: #{tpu_custom_call.1} parent=1 // pred_check_branch
      %25 = sbr.rel (0) target = $region9
    $region8: #{tpu_custom_call.1} parent=1 // pred_region
      _
    $region9: #{tpu_custom_call.1} parent=1 // pred_fallthru
      _
    // Predicated region
    $region10: #{tpu_custom_call.1} parent=1 // pred_check
      _
    $region11: #{tpu_custom_call.1} parent=1 // pred_check_branch
      %27 = sbr.rel (0) target = $region13
    $region12: #{tpu_custom_call.1} parent=1 // pred_region
      _
    $region13: #{tpu_custom_call.1} parent=1 // pred_fallthru
      _
    // Predicated region
    $region14: #{tpu_custom_call.1} parent=1 // pred_check
      _
    $region15: #{tpu_custom_call.1} parent=1 // pred_check_branch
      %29 = sbr.rel (0) target = $region17
    $region16: #{tpu_custom_call.1} parent=1 // pred_region
      _
    $region17: #{tpu_custom_call.1} parent=1 // pred_fallthru
      _
    // Predicated region
    $region18: #{tpu_custom_call.1} parent=1 // pred_check
      _
    $region19: #{tpu_custom_call.1} parent=1 // pred_check_branch
      %31 = sbr.rel (0) target = $region21
    $region20: #{tpu_custom_call.1} parent=1 // pred_region
      _
    $region21: #{tpu_custom_call.1} parent=1 // pred_fallthru
      _
    // Predicated region
    $region22: #{tpu_custom_call.1} parent=1 // pred_check
      _
    $region23: #{tpu_custom_call.1} parent=1 // pred_check_branch
      %33 = sbr.rel (0) target = $region25
    $region24: #{tpu_custom_call.1} parent=1 // pred_region
      _
    $region25: #{tpu_custom_call.1} parent=1 // pred_fallthru
      _
    // Predicated region
    $region26: #{tpu_custom_call.1} parent=1 // pred_check
      _
    $region27: #{tpu_custom_call.1} parent=1 // pred_check_branch
      %35 = sbr.rel (0) target = $region29
    $region28: #{tpu_custom_call.1} parent=1 // pred_region
      _
    $region29: #{tpu_custom_call.1} parent=1 // pred_fallthru
      _
    // Predicated region
    $region30: #{tpu_custom_call.1} parent=1 // pred_check
      _
    $region31: #{tpu_custom_call.1} parent=1 // pred_check_branch
      %37 = sbr.rel (0) target = $region33
    $region32: #{tpu_custom_call.1} parent=1 // pred_region
      _
    $region33: #{tpu_custom_call.1} parent=1 // pred_fallthru
      _
    // Predicated region
    $region34: #{tpu_custom_call.1} parent=1 // pred_check
      _
    $region35: #{tpu_custom_call.1} parent=1 // pred_check_branch
      %39 = sbr.rel (0) target = $region37
    $region36: #{tpu_custom_call.1} parent=1 // pred_region
      _
    $region37: #{tpu_custom_call.1} parent=1 // pred_fallthru
      _
    // Predicated region
    $region38: #{tpu_custom_call.1} parent=1 // pred_check
      _
    $region39: #{tpu_custom_call.1} parent=1 // pred_check_branch
      %41 = sbr.rel (0) target = $region41
    $region40: #{tpu_custom_call.1} parent=1 // pred_region
      _
    $region41: #{tpu_custom_call.1} parent=1 // pred_fallthru
      _
    // Predicated region
    $region42: #{tpu_custom_call.1} parent=1 // pred_check
      _
    $region43: #{tpu_custom_call.1} parent=1 // pred_check_branch
      %43 = sbr.rel (0) target = $region45
    $region44: #{tpu_custom_call.1} parent=1 // pred_region
      _
    $region45: #{tpu_custom_call.1} parent=1 // pred_fallthru
      _
    // Predicated region
    $region46: #{tpu_custom_call.1} parent=1 // pred_check
      _
    $region47: #{tpu_custom_call.1} parent=1 // pred_check_branch
      %45 = sbr.rel (0) target = $region49
    $region48: #{tpu_custom_call.1} parent=1 // pred_region
      _
    $region49: #{tpu_custom_call.1} parent=1 // pred_fallthru
      _
    // Predicated region
    $region50: #{tpu_custom_call.1} parent=1 // pred_check
      _
    $region51: #{tpu_custom_call.1} parent=1 // pred_check_branch
      %47 = sbr.rel (0) target = $region53
    $region52: #{tpu_custom_call.1} parent=1 // pred_region
      _
    $region53: #{tpu_custom_call.1} parent=1 // pred_fallthru
      _
    // Predicated region
    $region54: #{tpu_custom_call.1} parent=1 // pred_check
      _
    $region55: #{tpu_custom_call.1} parent=1 // pred_check_branch
      %49 = sbr.rel (0) target = $region57
    $region56: #{tpu_custom_call.1} parent=1 // pred_region
      _
    $region57: #{tpu_custom_call.1} parent=1 // pred_fallthru
      _
    // Predicated region
    $region58: #{tpu_custom_call.1} parent=1 // pred_check
      _
    $region59: #{tpu_custom_call.1} parent=1 // pred_check_branch
      %51 = sbr.rel (0) target = $region61
    $region60: #{tpu_custom_call.1} parent=1 // pred_region
      _
    $region61: #{tpu_custom_call.1} parent=1 // pred_fallthru
      _
    // Predicated region
    $region62: #{tpu_custom_call.1} parent=1 // pred_check
      _
    $region63: #{tpu_custom_call.1} parent=1 // pred_check_branch
      %53 = sbr.rel (0) target = $region65
    $region64: #{tpu_custom_call.1} parent=1 // pred_region
      _
    $region65: #{tpu_custom_call.1} parent=1 // pred_fallthru
      _
    %v54 = vld [vmem:[%s0] sm:$0xff]
    %v55 = vld [vmem:[%s0 + $0x8] sm:$0xff]
    %v56 = vld [vmem:[%s0 + $0x10] sm:$0xff]
    %v57 = vld [vmem:[%s0 + $0x18] sm:$0xff]
    %v58 = vld [vmem:[%s0 + $0x20] sm:$0xff]
    %v59 = vld [vmem:[%s0 + $0x28] sm:$0xff]
    %v60 = vld [vmem:[%s0 + $0x30] sm:$0xff]
    %v61 = vld [vmem:[%s0 + $0x38] sm:$0xff]
    %v62 = vld [vmem:[%s0 + $0x40] sm:$0xff]
    %v63 = vld [vmem:[%s0 + $0x48] sm:$0xff]
    %v64 = vld [vmem:[%s0 + $0x50] sm:$0xff]
    %v65 = vld [vmem:[%s0 + $0x58] sm:$0xff]
    %v66 = vld [vmem:[%s0 + $0x60] sm:$0xff]
    %v67 = vld [vmem:[%s0 + $0x68] sm:$0xff]
    %v68 = vld [vmem:[%s0 + $0x70] sm:$0xff]
    %v69 = vld [vmem:[%s0 + $0x78] sm:$0xff]
    %v70 = vld [vmem:[%s0 + $0x80] sm:$0xff]
    %v71 = vld [vmem:[%s0 + $0x88] sm:$0xff]
    %v72 = vld [vmem:[%s0 + $0x90] sm:$0xff]
    %v73 = vld [vmem:[%s0 + $0x98] sm:$0xff]
    %v74 = vld [vmem:[%s0 + $0xa0] sm:$0xff]
    %v75 = vld [vmem:[%s0 + $0xa8] sm:$0xff]
    %v76 = vld [vmem:[%s0 + $0xb0] sm:$0xff]
    %v77 = vld [vmem:[%s0 + $0xb8] sm:$0xff]
    %v78 = vld [vmem:[%s0 + $0xc0] sm:$0xff]
    %v79 = vld [vmem:[%s0 + $0xc8] sm:$0xff]
    %v80 = vld [vmem:[%s0 + $0xd0] sm:$0xff]
    %v81 = vld [vmem:[%s0 + $0xd8] sm:$0xff]
    %v82 = vld [vmem:[%s0 + $0xe0] sm:$0xff]
    %v83 = vld [vmem:[%s0 + $0xe8] sm:$0xff]
    %v84 = vld [vmem:[%s0 + $0xf0] sm:$0xff]
    %v85 = vld [vmem:[%s0 + $0xf8] sm:$0xff]
    %v86 = vld [vmem:[%s4] sm:$0xff]
    %v87 = vld [vmem:[%s4 + $0x8] sm:$0xff]
    %v88 = vld [vmem:[%s4 + $0x10] sm:$0xff]
    %v89 = vld [vmem:[%s4 + $0x18] sm:$0xff]
    %v90 = vld [vmem:[%s5] sm:$0x1]
    %v92 = vlaneseq
    %v93 = vshrl.u32 %v92, 7
    %v94 = vsub.s32 0, %v93
    %v95 = vrot.slane %v90, %v94
    %vm97 = vcmask 261120
    %v99 = vsel %vm97, %v54, 0
    %v102 = vsel %vm97, %v55, 0
    %v105 = vsel %vm97, %v56, 0
    %v108 = vsel %vm97, %v57, 0
    %v111 = vsel %vm97, %v58, 0
    %v114 = vsel %vm97, %v59, 0
    %v117 = vsel %vm97, %v60, 0
    %v120 = vsel %vm97, %v61, 0
    %v123 = vsel %vm97, %v62, 0
    %v126 = vsel %vm97, %v63, 0
    %v129 = vsel %vm97, %v64, 0
    %v132 = vsel %vm97, %v65, 0
    %v135 = vsel %vm97, %v66, 0
    %v138 = vsel %vm97, %v67, 0
    %v141 = vsel %vm97, %v68, 0
    %v144 = vsel %vm97, %v69, 0
    %v147 = vsel %vm97, %v70, 0
    %v150 = vsel %vm97, %v71, 0
    %v153 = vsel %vm97, %v72, 0
    %v156 = vsel %vm97, %v73, 0
    %v159 = vsel %vm97, %v74, 0
    %v162 = vsel %vm97, %v75, 0
    %v165 = vsel %vm97, %v76, 0
    %v168 = vsel %vm97, %v77, 0
    %v171 = vsel %vm97, %v78, 0
    %v174 = vsel %vm97, %v79, 0
    %v177 = vsel %vm97, %v80, 0
    %v180 = vsel %vm97, %v81, 0
    %v183 = vsel %vm97, %v82, 0
    %v186 = vsel %vm97, %v83, 0
    %v189 = vsel %vm97, %v84, 0
    %v192 = vsel %vm97, %v85, 0
    %194 = vmatprep.subr.mxu0 0.0
    %195 = vmatpush1.msra.mxu0 0.0
    %196 = vmatprep.subr.mxu0 0.0
    %197 = vmatpush1.msra.mxu0 0.0
    %198 = vmatprep.subr.mxu0 0.0
    %199 = vmatpush1.msra.mxu0 0.0
    %200 = vmatprep.subr.mxu0 0.0
    %201 = vmatpush1.msra.mxu0 0.0
    %202 = vmatprep.subr.mxu0 0.0
    %203 = vmatpush1.msra.mxu0 0.0
    %204 = vmatprep.subr.mxu0 0.0
    %205 = vmatpush1.msra.mxu0 0.0
    %206 = vmatprep.subr.mxu0 0.0
    %207 = vmatpush1.msra.mxu0 0.0
    %208 = vmatprep.subr.mxu0 0.0
    %209 = vmatpush1.msra.mxu0 0.0
    %210 = vmatprep.subr.mxu0 0.0
    %211 = vmatpush1.msra.mxu0 0.0
    %212 = vmatprep.subr.mxu0 0.0
    %213 = vmatpush1.msra.mxu0 0.0
    %214 = vmatprep.subr.mxu0 0.0
    %215 = vmatpush1.msra.mxu0 0.0
    %216 = vmatprep.subr.mxu0 0.0
    %217 = vmatpush1.msra.mxu0 0.0
    %218 = vmatprep.subr.mxu0 0.0
    %219 = vmatpush1.msra.mxu0 %v89
    %220 = vmatprep.subr.mxu0 0.0
    %221 = vmatpush1.msra.mxu0 %v88
    %222 = vmatprep.subr.mxu0 0.0
    %223 = vmatpush1.msra.mxu0 %v87
    %224 = vmatprep.subr.mxu0 0.0
    %225 = vmatpush1.msra.mxu0 %v86
    %226 = vmatprep.subr.mxu0 0.0
    %227 = vmatpush2.msra.mxu0 0.0
    %228 = vmatprep.subr.mxu0 0.0
    %229 = vmatpush2.msra.mxu0 0.0
    %230 = vmatprep.subr.mxu0 0.0
    %231 = vmatpush2.msra.mxu0 0.0
    %232 = vmatprep.subr.mxu0 0.0
    %233 = vmatpush2.msra.mxu0 0.0
    %234 = vmatprep.subr.mxu0 0.0
    %235 = vmatpush2.msra.mxu0 0.0
    %236 = vmatprep.subr.mxu0 0.0
    %237 = vmatpush2.msra.mxu0 0.0
    %238 = vmatprep.subr.mxu0 0.0
    %239 = vmatpush2.msra.mxu0 0.0
    %240 = vmatprep.subr.mxu0 0.0
    %241 = vmatpush2.msra.mxu0 0.0
    %242 = vmatprep.subr.mxu0 0.0
    %243 = vmatpush2.msra.mxu0 0.0
    %244 = vmatprep.subr.mxu0 0.0
    %245 = vmatpush2.msra.mxu0 0.0
    %246 = vmatprep.subr.mxu0 0.0
    %247 = vmatpush2.msra.mxu0 0.0
    %248 = vmatprep.subr.mxu0 0.0
    %249 = vmatpush2.msra.mxu0 0.0
    %250 = vmatprep.subr.mxu0 0.0
    %251 = vmatpush2.msra.mxu0 0.0
    %252 = vmatprep.subr.mxu0 0.0
    %253 = vmatpush2.msra.mxu0 0.0
    %254 = vmatprep.subr.mxu0 0.0
    %255 = vmatpush2.msra.mxu0 0.0
    %256 = vmatprep.subr.mxu0 0.0
    %257 = vmatpush2.msra.mxu0 0.0
    %258 = vmatprep.mubr.f32.mxu0 0.0
    %259 = vmatmul.mubr.f32.gmra.mxu0 %v99
    %v260 = vpop.f32.mrf.mxu0
    %v261 = vadd.f32 %v95, %v260
    %v262 = vpop.f32.mrf.mxu0
    %263 = vmatprep.mubr.f32.mxu0 0.0
    %264 = vmatmul.mubr.f32.gmra.mxu0 %v102
    %v265 = vpop.f32.mrf.mxu0
    %v266 = vadd.f32 %v95, %v265
    %v267 = vpop.f32.mrf.mxu0
    %268 = vmatprep.mubr.f32.mxu0 0.0
    %269 = vmatmul.mubr.f32.gmra.mxu0 %v105
    %v270 = vpop.f32.mrf.mxu0
    %v271 = vadd.f32 %v95, %v270
    %v272 = vpop.f32.mrf.mxu0
    %273 = vmatprep.mubr.f32.mxu0 0.0
    %274 = vmatmul.mubr.f32.gmra.mxu0 %v108
    %v275 = vpop.f32.mrf.mxu0
    %v276 = vadd.f32 %v95, %v275
    %v277 = vpop.f32.mrf.mxu0
    %278 = vmatprep.mubr.f32.mxu0 0.0
    %279 = vmatmul.mubr.f32.gmra.mxu0 %v111
    %v280 = vpop.f32.mrf.mxu0
    %v281 = vadd.f32 %v95, %v280
    %v282 = vpop.f32.mrf.mxu0
    %283 = vmatprep.mubr.f32.mxu0 0.0
    %284 = vmatmul.mubr.f32.gmra.mxu0 %v114
    %v285 = vpop.f32.mrf.mxu0
    %v286 = vadd.f32 %v95, %v285
    %v287 = vpop.f32.mrf.mxu0
    %288 = vmatprep.mubr.f32.mxu0 0.0
    %289 = vmatmul.mubr.f32.gmra.mxu0 %v117
    %v290 = vpop.f32.mrf.mxu0
    %v291 = vadd.f32 %v95, %v290
    %v292 = vpop.f32.mrf.mxu0
    %293 = vmatprep.mubr.f32.mxu0 0.0
    %294 = vmatmul.mubr.f32.gmra.mxu0 %v120
    %v295 = vpop.f32.mrf.mxu0
    %v296 = vadd.f32 %v95, %v295
    %v297 = vpop.f32.mrf.mxu0
    %298 = vmatprep.mubr.f32.mxu0 0.0
    %299 = vmatmul.mubr.f32.gmra.mxu0 %v123
    %v300 = vpop.f32.mrf.mxu0
    %v301 = vadd.f32 %v95, %v300
    %v302 = vpop.f32.mrf.mxu0
    %303 = vmatprep.mubr.f32.mxu0 0.0
    %304 = vmatmul.mubr.f32.gmra.mxu0 %v126
    %v305 = vpop.f32.mrf.mxu0
    %v306 = vadd.f32 %v95, %v305
    %v307 = vpop.f32.mrf.mxu0
    %308 = vmatprep.mubr.f32.mxu0 0.0
    %309 = vmatmul.mubr.f32.gmra.mxu0 %v129
    %v310 = vpop.f32.mrf.mxu0
    %v311 = vadd.f32 %v95, %v310
    %v312 = vpop.f32.mrf.mxu0
    %313 = vmatprep.mubr.f32.mxu0 0.0
    %314 = vmatmul.mubr.f32.gmra.mxu0 %v132
    %v315 = vpop.f32.mrf.mxu0
    %v316 = vadd.f32 %v95, %v315
    %v317 = vpop.f32.mrf.mxu0
    %318 = vmatprep.mubr.f32.mxu0 0.0
    %319 = vmatmul.mubr.f32.gmra.mxu0 %v135
    %v320 = vpop.f32.mrf.mxu0
    %v321 = vadd.f32 %v95, %v320
    %v322 = vpop.f32.mrf.mxu0
    %323 = vmatprep.mubr.f32.mxu0 0.0
    %324 = vmatmul.mubr.f32.gmra.mxu0 %v138
    %v325 = vpop.f32.mrf.mxu0
    %v326 = vadd.f32 %v95, %v325
    %v327 = vpop.f32.mrf.mxu0
    %328 = vmatprep.mubr.f32.mxu0 0.0
    %329 = vmatmul.mubr.f32.gmra.mxu0 %v141
    %v330 = vpop.f32.mrf.mxu0
    %v331 = vadd.f32 %v95, %v330
    %v332 = vpop.f32.mrf.mxu0
    %333 = vmatprep.mubr.f32.mxu0 0.0
    %334 = vmatmul.mubr.f32.gmra.mxu0 %v144
    %v335 = vpop.f32.mrf.mxu0
    %v336 = vadd.f32 %v95, %v335
    %v337 = vpop.f32.mrf.mxu0
    %338 = vmatprep.mubr.f32.mxu0 0.0
    %339 = vmatmul.mubr.f32.gmra.mxu0 %v147
    %v340 = vpop.f32.mrf.mxu0
    %v341 = vadd.f32 %v95, %v340
    %v342 = vpop.f32.mrf.mxu0
    %343 = vmatprep.mubr.f32.mxu0 0.0
    %344 = vmatmul.mubr.f32.gmra.mxu0 %v150
    %v345 = vpop.f32.mrf.mxu0
    %v346 = vadd.f32 %v95, %v345
    %v347 = vpop.f32.mrf.mxu0
    %348 = vmatprep.mubr.f32.mxu0 0.0
    %349 = vmatmul.mubr.f32.gmra.mxu0 %v153
    %v350 = vpop.f32.mrf.mxu0
    %v351 = vadd.f32 %v95, %v350
    %v352 = vpop.f32.mrf.mxu0
    %353 = vmatprep.mubr.f32.mxu0 0.0
    %354 = vmatmul.mubr.f32.gmra.mxu0 %v156
    %v355 = vpop.f32.mrf.mxu0
    %v356 = vadd.f32 %v95, %v355
    %v357 = vpop.f32.mrf.mxu0
    %358 = vmatprep.mubr.f32.mxu0 0.0
    %359 = vmatmul.mubr.f32.gmra.mxu0 %v159
    %v360 = vpop.f32.mrf.mxu0
    %v361 = vadd.f32 %v95, %v360
    %v362 = vpop.f32.mrf.mxu0
    %363 = vmatprep.mubr.f32.mxu0 0.0
    %364 = vmatmul.mubr.f32.gmra.mxu0 %v162
    %v365 = vpop.f32.mrf.mxu0
    %v366 = vadd.f32 %v95, %v365
    %v367 = vpop.f32.mrf.mxu0
    %368 = vmatprep.mubr.f32.mxu0 0.0
    %369 = vmatmul.mubr.f32.gmra.mxu0 %v165
    %v370 = vpop.f32.mrf.mxu0
    %v371 = vadd.f32 %v95, %v370
    %v372 = vpop.f32.mrf.mxu0
    %373 = vmatprep.mubr.f32.mxu0 0.0
    %374 = vmatmul.mubr.f32.gmra.mxu0 %v168
    %v375 = vpop.f32.mrf.mxu0
    %v376 = vadd.f32 %v95, %v375
    %v377 = vpop.f32.mrf.mxu0
    %378 = vmatprep.mubr.f32.mxu0 0.0
    %379 = vmatmul.mubr.f32.gmra.mxu0 %v171
    %v380 = vpop.f32.mrf.mxu0
    %v381 = vadd.f32 %v95, %v380
    %v382 = vpop.f32.mrf.mxu0
    %383 = vmatprep.mubr.f32.mxu0 0.0
    %384 = vmatmul.mubr.f32.gmra.mxu0 %v174
    %v385 = vpop.f32.mrf.mxu0
    %v386 = vadd.f32 %v95, %v385
    %v387 = vpop.f32.mrf.mxu0
    %388 = vmatprep.mubr.f32.mxu0 0.0
    %389 = vmatmul.mubr.f32.gmra.mxu0 %v177
    %v390 = vpop.f32.mrf.mxu0
    %v391 = vadd.f32 %v95, %v390
    %v392 = vpop.f32.mrf.mxu0
    %393 = vmatprep.mubr.f32.mxu0 0.0
    %394 = vmatmul.mubr.f32.gmra.mxu0 %v180
    %v395 = vpop.f32.mrf.mxu0
    %v396 = vadd.f32 %v95, %v395
    %v397 = vpop.f32.mrf.mxu0
    %398 = vmatprep.mubr.f32.mxu0 0.0
    %399 = vmatmul.mubr.f32.gmra.mxu0 %v183
    %v400 = vpop.f32.mrf.mxu0
    %v401 = vadd.f32 %v95, %v400
    %v402 = vpop.f32.mrf.mxu0
    %403 = vmatprep.mubr.f32.mxu0 0.0
    %404 = vmatmul.mubr.f32.gmra.mxu0 %v186
    %v405 = vpop.f32.mrf.mxu0
    %v406 = vadd.f32 %v95, %v405
    %v407 = vpop.f32.mrf.mxu0
    %408 = vmatprep.mubr.f32.mxu0 0.0
    %409 = vmatmul.mubr.f32.gmra.mxu0 %v189
    %v410 = vpop.f32.mrf.mxu0
    %v411 = vadd.f32 %v95, %v410
    %v412 = vpop.f32.mrf.mxu0
    %413 = vmatprep.mubr.f32.mxu0 0.0
    %414 = vmatmul.mubr.f32.gmra.mxu0 %v192
    %v415 = vpop.f32.mrf.mxu0
    %v416 = vadd.f32 %v95, %v415
    %v417 = vpop.f32.mrf.mxu0
    %418 = vdwg.mxu0
    %v419 = vld [vmem:[%s2] sm:$0xff]
    %v420 = vld [vmem:[%s2 + $0x8] sm:$0xff]
    %v421 = vld [vmem:[%s2 + $0x10] sm:$0xff]
    %v422 = vld [vmem:[%s2 + $0x18] sm:$0xff]
    %v423 = vld [vmem:[%s2 + $0x20] sm:$0xff]
    %v424 = vld [vmem:[%s2 + $0x28] sm:$0xff]
    %v425 = vld [vmem:[%s2 + $0x30] sm:$0xff]
    %v426 = vld [vmem:[%s2 + $0x38] sm:$0xff]
    %428 = vset.pattern.permute.xlu0 0
    %429 = vperm.xlu0 %428, %v419
    %v430 = vpop.permute.xlu0 %429
    %433 = vset.pattern.permute.xlu0 0
    %434 = vperm.xlu0 %433, %v420
    %v435 = vpop.permute.xlu0 %434
    %438 = vset.pattern.permute.xlu0 0
    %439 = vperm.xlu0 %438, %v421
    %v440 = vpop.permute.xlu0 %439
    %443 = vset.pattern.permute.xlu0 0
    %444 = vperm.xlu0 %443, %v422
    %v445 = vpop.permute.xlu0 %444
    %448 = vset.pattern.permute.xlu0 0
    %449 = vperm.xlu0 %448, %v423
    %v450 = vpop.permute.xlu0 %449
    %453 = vset.pattern.permute.xlu0 0
    %454 = vperm.xlu0 %453, %v424
    %v455 = vpop.permute.xlu0 %454
    %458 = vset.pattern.permute.xlu0 0
    %459 = vperm.xlu0 %458, %v425
    %v460 = vpop.permute.xlu0 %459
    %463 = vset.pattern.permute.xlu0 0
    %464 = vperm.xlu0 %463, %v426
    %v465 = vpop.permute.xlu0 %464
    %v467 = vadd.f32 %v261, %v430
    %v468 = vadd.f32 %v266, %v430
    %v469 = vadd.f32 %v271, %v430
    %v470 = vadd.f32 %v276, %v430
    %v471 = vadd.f32 %v281, %v435
    %v472 = vadd.f32 %v286, %v435
    %v473 = vadd.f32 %v291, %v435
    %v474 = vadd.f32 %v296, %v435
    %v475 = vadd.f32 %v301, %v440
    %v476 = vadd.f32 %v306, %v440
    %v477 = vadd.f32 %v311, %v440
    %v478 = vadd.f32 %v316, %v440
    %v479 = vadd.f32 %v321, %v445
    %v480 = vadd.f32 %v326, %v445
    %v481 = vadd.f32 %v331, %v445
    %v482 = vadd.f32 %v336, %v445
    %v483 = vadd.f32 %v341, %v450
    %v484 = vadd.f32 %v346, %v450
    %v485 = vadd.f32 %v351, %v450
    %v486 = vadd.f32 %v356, %v450
    %v487 = vadd.f32 %v361, %v455
    %v488 = vadd.f32 %v366, %v455
    %v489 = vadd.f32 %v371, %v455
    %v490 = vadd.f32 %v376, %v455
    %v491 = vadd.f32 %v381, %v460
    %v492 = vadd.f32 %v386, %v460
    %v493 = vadd.f32 %v391, %v460
    %v494 = vadd.f32 %v396, %v460
    %v495 = vadd.f32 %v401, %v465
    %v496 = vadd.f32 %v406, %v465
    %v497 = vadd.f32 %v411, %v465
    %v498 = vadd.f32 %v416, %v465
    %v499 = vrot.slane %v467, 4
    %v500 = vmax.f32 %v467, %v499
    %v501 = vrot.slane %v500, 2
    %v502 = vmax.f32 %v500, %v501
    %v503 = vrot.slane %v502, 1
    %v504 = vmax.f32 %v502, %v503
    %v505 = vrot.slane %v468, 4
    %v506 = vmax.f32 %v468, %v505
    %v507 = vrot.slane %v506, 2
    %v508 = vmax.f32 %v506, %v507
    %v509 = vrot.slane %v508, 1
    %v510 = vmax.f32 %v508, %v509
    %v511 = vrot.slane %v469, 4
    %v512 = vmax.f32 %v469, %v511
    %v513 = vrot.slane %v512, 2
    %v514 = vmax.f32 %v512, %v513
    %v515 = vrot.slane %v514, 1
    %v516 = vmax.f32 %v514, %v515
    %v517 = vrot.slane %v470, 4
    %v518 = vmax.f32 %v470, %v517
    %v519 = vrot.slane %v518, 2
    %v520 = vmax.f32 %v518, %v519
    %v521 = vrot.slane %v520, 1
    %v522 = vmax.f32 %v520, %v521
    %v523 = vrot.slane %v471, 4
    %v524 = vmax.f32 %v471, %v523
    %v525 = vrot.slane %v524, 2
    %v526 = vmax.f32 %v524, %v525
    %v527 = vrot.slane %v526, 1
    %v528 = vmax.f32 %v526, %v527
    %v529 = vrot.slane %v472, 4
    %v530 = vmax.f32 %v472, %v529
    %v531 = vrot.slane %v530, 2
    %v532 = vmax.f32 %v530, %v531
    %v533 = vrot.slane %v532, 1
    %v534 = vmax.f32 %v532, %v533
    %v535 = vrot.slane %v473, 4
    %v536 = vmax.f32 %v473, %v535
    %v537 = vrot.slane %v536, 2
    %v538 = vmax.f32 %v536, %v537
    %v539 = vrot.slane %v538, 1
    %v540 = vmax.f32 %v538, %v539
    %v541 = vrot.slane %v474, 4
    %v542 = vmax.f32 %v474, %v541
    %v543 = vrot.slane %v542, 2
    %v544 = vmax.f32 %v542, %v543
    %v545 = vrot.slane %v544, 1
    %v546 = vmax.f32 %v544, %v545
    %v547 = vrot.slane %v475, 4
    %v548 = vmax.f32 %v475, %v547
    %v549 = vrot.slane %v548, 2
    %v550 = vmax.f32 %v548, %v549
    %v551 = vrot.slane %v550, 1
    %v552 = vmax.f32 %v550, %v551
    %v553 = vrot.slane %v476, 4
    %v554 = vmax.f32 %v476, %v553
    %v555 = vrot.slane %v554, 2
    %v556 = vmax.f32 %v554, %v555
    %v557 = vrot.slane %v556, 1
    %v558 = vmax.f32 %v556, %v557
    %v559 = vrot.slane %v477, 4
    %v560 = vmax.f32 %v477, %v559
    %v561 = vrot.slane %v560, 2
    %v562 = vmax.f32 %v560, %v561
    %v563 = vrot.slane %v562, 1
    %v564 = vmax.f32 %v562, %v563
    %v565 = vrot.slane %v478, 4
    %v566 = vmax.f32 %v478, %v565
    %v567 = vrot.slane %v566, 2
    %v568 = vmax.f32 %v566, %v567
    %v569 = vrot.slane %v568, 1
    %v570 = vmax.f32 %v568, %v569
    %v571 = vrot.slane %v479, 4
    %v572 = vmax.f32 %v479, %v571
    %v573 = vrot.slane %v572, 2
    %v574 = vmax.f32 %v572, %v573
    %v575 = vrot.slane %v574, 1
    %v576 = vmax.f32 %v574, %v575
    %v577 = vrot.slane %v480, 4
    %v578 = vmax.f32 %v480, %v577
    %v579 = vrot.slane %v578, 2
    %v580 = vmax.f32 %v578, %v579
    %v581 = vrot.slane %v580, 1
    %v582 = vmax.f32 %v580, %v581
    %v583 = vrot.slane %v481, 4
    %v584 = vmax.f32 %v481, %v583
    %v585 = vrot.slane %v584, 2
    %v586 = vmax.f32 %v584, %v585
    %v587 = vrot.slane %v586, 1
    %v588 = vmax.f32 %v586, %v587
    %v589 = vrot.slane %v482, 4
    %v590 = vmax.f32 %v482, %v589
    %v591 = vrot.slane %v590, 2
    %v592 = vmax.f32 %v590, %v591
    %v593 = vrot.slane %v592, 1
    %v594 = vmax.f32 %v592, %v593
    %v595 = vrot.slane %v483, 4
    %v596 = vmax.f32 %v483, %v595
    %v597 = vrot.slane %v596, 2
    %v598 = vmax.f32 %v596, %v597
    %v599 = vrot.slane %v598, 1
    %v600 = vmax.f32 %v598, %v599
    %v601 = vrot.slane %v484, 4
    %v602 = vmax.f32 %v484, %v601
    %v603 = vrot.slane %v602, 2
    %v604 = vmax.f32 %v602, %v603
    %v605 = vrot.slane %v604, 1
    %v606 = vmax.f32 %v604, %v605
    %v607 = vrot.slane %v485, 4
    %v608 = vmax.f32 %v485, %v607
    %v609 = vrot.slane %v608, 2
    %v610 = vmax.f32 %v608, %v609
    %v611 = vrot.slane %v610, 1
    %v612 = vmax.f32 %v610, %v611
    %v613 = vrot.slane %v486, 4
    %v614 = vmax.f32 %v486, %v613
    %v615 = vrot.slane %v614, 2
    %v616 = vmax.f32 %v614, %v615
    %v617 = vrot.slane %v616, 1
    %v618 = vmax.f32 %v616, %v617
    %v619 = vrot.slane %v487, 4
    %v620 = vmax.f32 %v487, %v619
    %v621 = vrot.slane %v620, 2
    %v622 = vmax.f32 %v620, %v621
    %v623 = vrot.slane %v622, 1
    %v624 = vmax.f32 %v622, %v623
    %v625 = vrot.slane %v488, 4
    %v626 = vmax.f32 %v488, %v625
    %v627 = vrot.slane %v626, 2
    %v628 = vmax.f32 %v626, %v627
    %v629 = vrot.slane %v628, 1
    %v630 = vmax.f32 %v628, %v629
    %v631 = vrot.slane %v489, 4
    %v632 = vmax.f32 %v489, %v631
    %v633 = vrot.slane %v632, 2
    %v634 = vmax.f32 %v632, %v633
    %v635 = vrot.slane %v634, 1
    %v636 = vmax.f32 %v634, %v635
    %v637 = vrot.slane %v490, 4
    %v638 = vmax.f32 %v490, %v637
    %v639 = vrot.slane %v638, 2
    %v640 = vmax.f32 %v638, %v639
    %v641 = vrot.slane %v640, 1
    %v642 = vmax.f32 %v640, %v641
    %v643 = vrot.slane %v491, 4
    %v644 = vmax.f32 %v491, %v643
    %v645 = vrot.slane %v644, 2
    %v646 = vmax.f32 %v644, %v645
    %v647 = vrot.slane %v646, 1
    %v648 = vmax.f32 %v646, %v647
    %v649 = vrot.slane %v492, 4
    %v650 = vmax.f32 %v492, %v649
    %v651 = vrot.slane %v650, 2
    %v652 = vmax.f32 %v650, %v651
    %v653 = vrot.slane %v652, 1
    %v654 = vmax.f32 %v652, %v653
    %v655 = vrot.slane %v493, 4
    %v656 = vmax.f32 %v493, %v655
    %v657 = vrot.slane %v656, 2
    %v658 = vmax.f32 %v656, %v657
    %v659 = vrot.slane %v658, 1
    %v660 = vmax.f32 %v658, %v659
    %v661 = vrot.slane %v494, 4
    %v662 = vmax.f32 %v494, %v661
    %v663 = vrot.slane %v662, 2
    %v664 = vmax.f32 %v662, %v663
    %v665 = vrot.slane %v664, 1
    %v666 = vmax.f32 %v664, %v665
    %v667 = vrot.slane %v495, 4
    %v668 = vmax.f32 %v495, %v667
    %v669 = vrot.slane %v668, 2
    %v670 = vmax.f32 %v668, %v669
    %v671 = vrot.slane %v670, 1
    %v672 = vmax.f32 %v670, %v671
    %v673 = vrot.slane %v496, 4
    %v674 = vmax.f32 %v496, %v673
    %v675 = vrot.slane %v674, 2
    %v676 = vmax.f32 %v674, %v675
    %v677 = vrot.slane %v676, 1
    %v678 = vmax.f32 %v676, %v677
    %v679 = vrot.slane %v497, 4
    %v680 = vmax.f32 %v497, %v679
    %v681 = vrot.slane %v680, 2
    %v682 = vmax.f32 %v680, %v681
    %v683 = vrot.slane %v682, 1
    %v684 = vmax.f32 %v682, %v683
    %v685 = vrot.slane %v498, 4
    %v686 = vmax.f32 %v498, %v685
    %v687 = vrot.slane %v686, 2
    %v688 = vmax.f32 %v686, %v687
    %v689 = vrot.slane %v688, 1
    %v690 = vmax.f32 %v688, %v689
    %v691 = vld [vmem:[%s1] sm:$0xff]
    %v692 = vld [vmem:[%s1 + $0x8] sm:$0xff]
    %v693 = vld [vmem:[%s1 + $0x10] sm:$0xff]
    %v694 = vld [vmem:[%s1 + $0x18] sm:$0xff]
    %v695 = vld [vmem:[%s1 + $0x20] sm:$0xff]
    %v696 = vld [vmem:[%s1 + $0x28] sm:$0xff]
    %v697 = vld [vmem:[%s1 + $0x30] sm:$0xff]
    %v698 = vld [vmem:[%s1 + $0x38] sm:$0xff]
    %v699 = vld [vmem:[%s1 + $0x40] sm:$0xff]
    %v700 = vld [vmem:[%s1 + $0x48] sm:$0xff]
    %v701 = vld [vmem:[%s1 + $0x50] sm:$0xff]
    %v702 = vld [vmem:[%s1 + $0x58] sm:$0xff]
    %v703 = vld [vmem:[%s1 + $0x60] sm:$0xff]
    %v704 = vld [vmem:[%s1 + $0x68] sm:$0xff]
    %v705 = vld [vmem:[%s1 + $0x70] sm:$0xff]
    %v706 = vld [vmem:[%s1 + $0x78] sm:$0xff]
    %v707 = vld [vmem:[%s1 + $0x80] sm:$0xff]
    %v708 = vld [vmem:[%s1 + $0x88] sm:$0xff]
    %v709 = vld [vmem:[%s1 + $0x90] sm:$0xff]
    %v710 = vld [vmem:[%s1 + $0x98] sm:$0xff]
    %v711 = vld [vmem:[%s1 + $0xa0] sm:$0xff]
    %v712 = vld [vmem:[%s1 + $0xa8] sm:$0xff]
    %v713 = vld [vmem:[%s1 + $0xb0] sm:$0xff]
    %v714 = vld [vmem:[%s1 + $0xb8] sm:$0xff]
    %v715 = vld [vmem:[%s1 + $0xc0] sm:$0xff]
    %v716 = vld [vmem:[%s1 + $0xc8] sm:$0xff]
    %v717 = vld [vmem:[%s1 + $0xd0] sm:$0xff]
    %v718 = vld [vmem:[%s1 + $0xd8] sm:$0xff]
    %v719 = vld [vmem:[%s1 + $0xe0] sm:$0xff]
    %v720 = vld [vmem:[%s1 + $0xe8] sm:$0xff]
    %v721 = vld [vmem:[%s1 + $0xf0] sm:$0xff]
    %v722 = vld [vmem:[%s1 + $0xf8] sm:$0xff]
    %v723 = vld [vmem:[%s6] sm:$0xff]
    %v724 = vld [vmem:[%s6 + $0x8] sm:$0xff]
    %v725 = vld [vmem:[%s6 + $0x10] sm:$0xff]
    %v726 = vld [vmem:[%s6 + $0x18] sm:$0xff]
    %v727 = vld [vmem:[%s7] sm:$0x1]
    %v729 = vlaneseq
    %v730 = vshrl.u32 %v729, 7
    %v731 = vsub.s32 0, %v730
    %v732 = vrot.slane %v727, %v731
    %v735 = vsel %vm97, %v691, 0
    %v738 = vsel %vm97, %v692, 0
    %v741 = vsel %vm97, %v693, 0
    %v744 = vsel %vm97, %v694, 0
    %v747 = vsel %vm97, %v695, 0
    %v750 = vsel %vm97, %v696, 0
    %v753 = vsel %vm97, %v697, 0
    %v756 = vsel %vm97, %v698, 0
    %v759 = vsel %vm97, %v699, 0
    %v762 = vsel %vm97, %v700, 0
    %v765 = vsel %vm97, %v701, 0
    %v768 = vsel %vm97, %v702, 0
    %v771 = vsel %vm97, %v703, 0
    %v774 = vsel %vm97, %v704, 0
    %v777 = vsel %vm97, %v705, 0
    %v780 = vsel %vm97, %v706, 0
    %v783 = vsel %vm97, %v707, 0
    %v786 = vsel %vm97, %v708, 0
    %v789 = vsel %vm97, %v709, 0
    %v792 = vsel %vm97, %v710, 0
    %v795 = vsel %vm97, %v711, 0
    %v798 = vsel %vm97, %v712, 0
    %v801 = vsel %vm97, %v713, 0
    %v804 = vsel %vm97, %v714, 0
    %v807 = vsel %vm97, %v715, 0
    %v810 = vsel %vm97, %v716, 0
    %v813 = vsel %vm97, %v717, 0
    %v816 = vsel %vm97, %v718, 0
    %v819 = vsel %vm97, %v719, 0
    %v822 = vsel %vm97, %v720, 0
    %v825 = vsel %vm97, %v721, 0
    %v828 = vsel %vm97, %v722, 0
    %830 = vmatprep.subr.mxu0 0.0
    %831 = vmatpush1.msra.mxu0 0.0
    %832 = vmatprep.subr.mxu0 0.0
    %833 = vmatpush1.msra.mxu0 0.0
    %834 = vmatprep.subr.mxu0 0.0
    %835 = vmatpush1.msra.mxu0 0.0
    %836 = vmatprep.subr.mxu0 0.0
    %837 = vmatpush1.msra.mxu0 0.0
    %838 = vmatprep.subr.mxu0 0.0
    %839 = vmatpush1.msra.mxu0 0.0
    %840 = vmatprep.subr.mxu0 0.0
    %841 = vmatpush1.msra.mxu0 0.0
    %842 = vmatprep.subr.mxu0 0.0
    %843 = vmatpush1.msra.mxu0 0.0
    %844 = vmatprep.subr.mxu0 0.0
    %845 = vmatpush1.msra.mxu0 0.0
    %846 = vmatprep.subr.mxu0 0.0
    %847 = vmatpush1.msra.mxu0 0.0
    %848 = vmatprep.subr.mxu0 0.0
    %849 = vmatpush1.msra.mxu0 0.0
    %850 = vmatprep.subr.mxu0 0.0
    %851 = vmatpush1.msra.mxu0 0.0
    %852 = vmatprep.subr.mxu0 0.0
    %853 = vmatpush1.msra.mxu0 0.0
    %854 = vmatprep.subr.mxu0 0.0
    %855 = vmatpush1.msra.mxu0 %v726
    %856 = vmatprep.subr.mxu0 0.0
    %857 = vmatpush1.msra.mxu0 %v725
    %858 = vmatprep.subr.mxu0 0.0
    %859 = vmatpush1.msra.mxu0 %v724
    %860 = vmatprep.subr.mxu0 0.0
    %861 = vmatpush1.msra.mxu0 %v723
    %862 = vmatprep.subr.mxu0 0.0
    %863 = vmatpush2.msra.mxu0 0.0
    %864 = vmatprep.subr.mxu0 0.0
    %865 = vmatpush2.msra.mxu0 0.0
    %866 = vmatprep.subr.mxu0 0.0
    %867 = vmatpush2.msra.mxu0 0.0
    %868 = vmatprep.subr.mxu0 0.0
    %869 = vmatpush2.msra.mxu0 0.0
    %870 = vmatprep.subr.mxu0 0.0
    %871 = vmatpush2.msra.mxu0 0.0
    %872 = vmatprep.subr.mxu0 0.0
    %873 = vmatpush2.msra.mxu0 0.0
    %874 = vmatprep.subr.mxu0 0.0
    %875 = vmatpush2.msra.mxu0 0.0
    %876 = vmatprep.subr.mxu0 0.0
    %877 = vmatpush2.msra.mxu0 0.0
    %878 = vmatprep.subr.mxu0 0.0
    %879 = vmatpush2.msra.mxu0 0.0
    %880 = vmatprep.subr.mxu0 0.0
    %881 = vmatpush2.msra.mxu0 0.0
    %882 = vmatprep.subr.mxu0 0.0
    %883 = vmatpush2.msra.mxu0 0.0
    %884 = vmatprep.subr.mxu0 0.0
    %885 = vmatpush2.msra.mxu0 0.0
    %886 = vmatprep.subr.mxu0 0.0
    %887 = vmatpush2.msra.mxu0 0.0
    %888 = vmatprep.subr.mxu0 0.0
    %889 = vmatpush2.msra.mxu0 0.0
    %890 = vmatprep.subr.mxu0 0.0
    %891 = vmatpush2.msra.mxu0 0.0
    %892 = vmatprep.subr.mxu0 0.0
    %893 = vmatpush2.msra.mxu0 0.0
    %894 = vmatprep.mubr.f32.mxu0 0.0
    %895 = vmatmul.mubr.f32.gmra.mxu0 %v735
    %v896 = vpop.f32.mrf.mxu0
    %v897 = vadd.f32 %v732, %v896
    %v898 = vpop.f32.mrf.mxu0
    %899 = vmatprep.mubr.f32.mxu0 0.0
    %900 = vmatmul.mubr.f32.gmra.mxu0 %v738
    %v901 = vpop.f32.mrf.mxu0
    %v902 = vadd.f32 %v732, %v901
    %v903 = vpop.f32.mrf.mxu0
    %904 = vmatprep.mubr.f32.mxu0 0.0
    %905 = vmatmul.mubr.f32.gmra.mxu0 %v741
    %v906 = vpop.f32.mrf.mxu0
    %v907 = vadd.f32 %v732, %v906
    %v908 = vpop.f32.mrf.mxu0
    %909 = vmatprep.mubr.f32.mxu0 0.0
    %910 = vmatmul.mubr.f32.gmra.mxu0 %v744
    %v911 = vpop.f32.mrf.mxu0
    %v912 = vadd.f32 %v732, %v911
    %v913 = vpop.f32.mrf.mxu0
    %914 = vmatprep.mubr.f32.mxu0 0.0
    %915 = vmatmul.mubr.f32.gmra.mxu0 %v747
    %v916 = vpop.f32.mrf.mxu0
    %v917 = vadd.f32 %v732, %v916
    %v918 = vpop.f32.mrf.mxu0
    %919 = vmatprep.mubr.f32.mxu0 0.0
    %920 = vmatmul.mubr.f32.gmra.mxu0 %v750
    %v921 = vpop.f32.mrf.mxu0
    %v922 = vadd.f32 %v732, %v921
    %v923 = vpop.f32.mrf.mxu0
    %924 = vmatprep.mubr.f32.mxu0 0.0
    %925 = vmatmul.mubr.f32.gmra.mxu0 %v753
    %v926 = vpop.f32.mrf.mxu0
    %v927 = vadd.f32 %v732, %v926
    %v928 = vpop.f32.mrf.mxu0
    %929 = vmatprep.mubr.f32.mxu0 0.0
    %930 = vmatmul.mubr.f32.gmra.mxu0 %v756
    %v931 = vpop.f32.mrf.mxu0
    %v932 = vadd.f32 %v732, %v931
    %v933 = vpop.f32.mrf.mxu0
    %934 = vmatprep.mubr.f32.mxu0 0.0
    %935 = vmatmul.mubr.f32.gmra.mxu0 %v759
    %v936 = vpop.f32.mrf.mxu0
    %v937 = vadd.f32 %v732, %v936
    %v938 = vpop.f32.mrf.mxu0
    %939 = vmatprep.mubr.f32.mxu0 0.0
    %940 = vmatmul.mubr.f32.gmra.mxu0 %v762
    %v941 = vpop.f32.mrf.mxu0
    %v942 = vadd.f32 %v732, %v941
    %v943 = vpop.f32.mrf.mxu0
    %944 = vmatprep.mubr.f32.mxu0 0.0
    %945 = vmatmul.mubr.f32.gmra.mxu0 %v765
    %v946 = vpop.f32.mrf.mxu0
    %v947 = vadd.f32 %v732, %v946
    %v948 = vpop.f32.mrf.mxu0
    %949 = vmatprep.mubr.f32.mxu0 0.0
    %950 = vmatmul.mubr.f32.gmra.mxu0 %v768
    %v951 = vpop.f32.mrf.mxu0
    %v952 = vadd.f32 %v732, %v951
    %v953 = vpop.f32.mrf.mxu0
    %954 = vmatprep.mubr.f32.mxu0 0.0
    %955 = vmatmul.mubr.f32.gmra.mxu0 %v771
    %v956 = vpop.f32.mrf.mxu0
    %v957 = vadd.f32 %v732, %v956
    %v958 = vpop.f32.mrf.mxu0
    %959 = vmatprep.mubr.f32.mxu0 0.0
    %960 = vmatmul.mubr.f32.gmra.mxu0 %v774
    %v961 = vpop.f32.mrf.mxu0
    %v962 = vadd.f32 %v732, %v961
    %v963 = vpop.f32.mrf.mxu0
    %964 = vmatprep.mubr.f32.mxu0 0.0
    %965 = vmatmul.mubr.f32.gmra.mxu0 %v777
    %v966 = vpop.f32.mrf.mxu0
    %v967 = vadd.f32 %v732, %v966
    %v968 = vpop.f32.mrf.mxu0
    %969 = vmatprep.mubr.f32.mxu0 0.0
    %970 = vmatmul.mubr.f32.gmra.mxu0 %v780
    %v971 = vpop.f32.mrf.mxu0
    %v972 = vadd.f32 %v732, %v971
    %v973 = vpop.f32.mrf.mxu0
    %974 = vmatprep.mubr.f32.mxu0 0.0
    %975 = vmatmul.mubr.f32.gmra.mxu0 %v783
    %v976 = vpop.f32.mrf.mxu0
    %v977 = vadd.f32 %v732, %v976
    %v978 = vpop.f32.mrf.mxu0
    %979 = vmatprep.mubr.f32.mxu0 0.0
    %980 = vmatmul.mubr.f32.gmra.mxu0 %v786
    %v981 = vpop.f32.mrf.mxu0
    %v982 = vadd.f32 %v732, %v981
    %v983 = vpop.f32.mrf.mxu0
    %984 = vmatprep.mubr.f32.mxu0 0.0
    %985 = vmatmul.mubr.f32.gmra.mxu0 %v789
    %v986 = vpop.f32.mrf.mxu0
    %v987 = vadd.f32 %v732, %v986
    %v988 = vpop.f32.mrf.mxu0
    %989 = vmatprep.mubr.f32.mxu0 0.0
    %990 = vmatmul.mubr.f32.gmra.mxu0 %v792
    %v991 = vpop.f32.mrf.mxu0
    %v992 = vadd.f32 %v732, %v991
    %v993 = vpop.f32.mrf.mxu0
    %994 = vmatprep.mubr.f32.mxu0 0.0
    %995 = vmatmul.mubr.f32.gmra.mxu0 %v795
    %v996 = vpop.f32.mrf.mxu0
    %v997 = vadd.f32 %v732, %v996
    %v998 = vpop.f32.mrf.mxu0
    %999 = vmatprep.mubr.f32.mxu0 0.0
    %1000 = vmatmul.mubr.f32.gmra.mxu0 %v798
    %v1001 = vpop.f32.mrf.mxu0
    %v1002 = vadd.f32 %v732, %v1001
    %v1003 = vpop.f32.mrf.mxu0
    %1004 = vmatprep.mubr.f32.mxu0 0.0
    %1005 = vmatmul.mubr.f32.gmra.mxu0 %v801
    %v1006 = vpop.f32.mrf.mxu0
    %v1007 = vadd.f32 %v732, %v1006
    %v1008 = vpop.f32.mrf.mxu0
    %1009 = vmatprep.mubr.f32.mxu0 0.0
    %1010 = vmatmul.mubr.f32.gmra.mxu0 %v804
    %v1011 = vpop.f32.mrf.mxu0
    %v1012 = vadd.f32 %v732, %v1011
    %v1013 = vpop.f32.mrf.mxu0
    %1014 = vmatprep.mubr.f32.mxu0 0.0
    %1015 = vmatmul.mubr.f32.gmra.mxu0 %v807
    %v1016 = vpop.f32.mrf.mxu0
    %v1017 = vadd.f32 %v732, %v1016
    %v1018 = vpop.f32.mrf.mxu0
    %1019 = vmatprep.mubr.f32.mxu0 0.0
    %1020 = vmatmul.mubr.f32.gmra.mxu0 %v810
    %v1021 = vpop.f32.mrf.mxu0
    %v1022 = vadd.f32 %v732, %v1021
    %v1023 = vpop.f32.mrf.mxu0
    %1024 = vmatprep.mubr.f32.mxu0 0.0
    %1025 = vmatmul.mubr.f32.gmra.mxu0 %v813
    %v1026 = vpop.f32.mrf.mxu0
    %v1027 = vadd.f32 %v732, %v1026
    %v1028 = vpop.f32.mrf.mxu0
    %1029 = vmatprep.mubr.f32.mxu0 0.0
    %1030 = vmatmul.mubr.f32.gmra.mxu0 %v816
    %v1031 = vpop.f32.mrf.mxu0
    %v1032 = vadd.f32 %v732, %v1031
    %v1033 = vpop.f32.mrf.mxu0
    %1034 = vmatprep.mubr.f32.mxu0 0.0
    %1035 = vmatmul.mubr.f32.gmra.mxu0 %v819
    %v1036 = vpop.f32.mrf.mxu0
    %v1037 = vadd.f32 %v732, %v1036
    %v1038 = vpop.f32.mrf.mxu0
    %1039 = vmatprep.mubr.f32.mxu0 0.0
    %1040 = vmatmul.mubr.f32.gmra.mxu0 %v822
    %v1041 = vpop.f32.mrf.mxu0
    %v1042 = vadd.f32 %v732, %v1041
    %v1043 = vpop.f32.mrf.mxu0
    %1044 = vmatprep.mubr.f32.mxu0 0.0
    %1045 = vmatmul.mubr.f32.gmra.mxu0 %v825
    %v1046 = vpop.f32.mrf.mxu0
    %v1047 = vadd.f32 %v732, %v1046
    %v1048 = vpop.f32.mrf.mxu0
    %1049 = vmatprep.mubr.f32.mxu0 0.0
    %1050 = vmatmul.mubr.f32.gmra.mxu0 %v828
    %v1051 = vpop.f32.mrf.mxu0
    %v1052 = vadd.f32 %v732, %v1051
    %v1053 = vpop.f32.mrf.mxu0
    %1054 = vdwg.mxu0
    %v1055 = vld [vmem:[%s3] sm:$0xff]
    %v1056 = vld [vmem:[%s3 + $0x8] sm:$0xff]
    %v1057 = vld [vmem:[%s3 + $0x10] sm:$0xff]
    %v1058 = vld [vmem:[%s3 + $0x18] sm:$0xff]
    %v1059 = vld [vmem:[%s3 + $0x20] sm:$0xff]
    %v1060 = vld [vmem:[%s3 + $0x28] sm:$0xff]
    %v1061 = vld [vmem:[%s3 + $0x30] sm:$0xff]
    %v1062 = vld [vmem:[%s3 + $0x38] sm:$0xff]
    %1064 = vset.pattern.permute.xlu0 0
    %1065 = vperm.xlu0 %1064, %v1055
    %v1066 = vpop.permute.xlu0 %1065
    %1069 = vset.pattern.permute.xlu0 0
    %1070 = vperm.xlu0 %1069, %v1056
    %v1071 = vpop.permute.xlu0 %1070
    %1074 = vset.pattern.permute.xlu0 0
    %1075 = vperm.xlu0 %1074, %v1057
    %v1076 = vpop.permute.xlu0 %1075
    %1079 = vset.pattern.permute.xlu0 0
    %1080 = vperm.xlu0 %1079, %v1058
    %v1081 = vpop.permute.xlu0 %1080
    %1084 = vset.pattern.permute.xlu0 0
    %1085 = vperm.xlu0 %1084, %v1059
    %v1086 = vpop.permute.xlu0 %1085
    %1089 = vset.pattern.permute.xlu0 0
    %1090 = vperm.xlu0 %1089, %v1060
    %v1091 = vpop.permute.xlu0 %1090
    %1094 = vset.pattern.permute.xlu0 0
    %1095 = vperm.xlu0 %1094, %v1061
    %v1096 = vpop.permute.xlu0 %1095
    %1099 = vset.pattern.permute.xlu0 0
    %1100 = vperm.xlu0 %1099, %v1062
    %v1101 = vpop.permute.xlu0 %1100
    %v1103 = vadd.f32 %v897, %v1066
    %v1104 = vadd.f32 %v902, %v1066
    %v1105 = vadd.f32 %v907, %v1066
    %v1106 = vadd.f32 %v912, %v1066
    %v1107 = vadd.f32 %v917, %v1071
    %v1108 = vadd.f32 %v922, %v1071
    %v1109 = vadd.f32 %v927, %v1071
    %v1110 = vadd.f32 %v932, %v1071
    %v1111 = vadd.f32 %v937, %v1076
    %v1112 = vadd.f32 %v942, %v1076
    %v1113 = vadd.f32 %v947, %v1076
    %v1114 = vadd.f32 %v952, %v1076
    %v1115 = vadd.f32 %v957, %v1081
    %v1116 = vadd.f32 %v962, %v1081
    %v1117 = vadd.f32 %v967, %v1081
    %v1118 = vadd.f32 %v972, %v1081
    %v1119 = vadd.f32 %v977, %v1086
    %v1120 = vadd.f32 %v982, %v1086
    %v1121 = vadd.f32 %v987, %v1086
    %v1122 = vadd.f32 %v992, %v1086
    %v1123 = vadd.f32 %v997, %v1091
    %v1124 = vadd.f32 %v1002, %v1091
    %v1125 = vadd.f32 %v1007, %v1091
    %v1126 = vadd.f32 %v1012, %v1091
    %v1127 = vadd.f32 %v1017, %v1096
    %v1128 = vadd.f32 %v1022, %v1096
    %v1129 = vadd.f32 %v1027, %v1096
    %v1130 = vadd.f32 %v1032, %v1096
    %v1131 = vadd.f32 %v1037, %v1101
    %v1132 = vadd.f32 %v1042, %v1101
    %v1133 = vadd.f32 %v1047, %v1101
    %v1134 = vadd.f32 %v1052, %v1101
    %v1135 = vrot.slane %v1103, 4
    %v1136 = vmax.f32 %v1103, %v1135
    %v1137 = vrot.slane %v1136, 2
    %v1138 = vmax.f32 %v1136, %v1137
    %v1139 = vrot.slane %v1138, 1
    %v1140 = vmax.f32 %v1138, %v1139
    %v1141 = vrot.slane %v1104, 4
    %v1142 = vmax.f32 %v1104, %v1141
    %v1143 = vrot.slane %v1142, 2
    %v1144 = vmax.f32 %v1142, %v1143
    %v1145 = vrot.slane %v1144, 1
    %v1146 = vmax.f32 %v1144, %v1145
    %v1147 = vrot.slane %v1105, 4
    %v1148 = vmax.f32 %v1105, %v1147
    %v1149 = vrot.slane %v1148, 2
    %v1150 = vmax.f32 %v1148, %v1149
    %v1151 = vrot.slane %v1150, 1
    %v1152 = vmax.f32 %v1150, %v1151
    %v1153 = vrot.slane %v1106, 4
    %v1154 = vmax.f32 %v1106, %v1153
    %v1155 = vrot.slane %v1154, 2
    %v1156 = vmax.f32 %v1154, %v1155
    %v1157 = vrot.slane %v1156, 1
    %v1158 = vmax.f32 %v1156, %v1157
    %v1159 = vrot.slane %v1107, 4
    %v1160 = vmax.f32 %v1107, %v1159
    %v1161 = vrot.slane %v1160, 2
    %v1162 = vmax.f32 %v1160, %v1161
    %v1163 = vrot.slane %v1162, 1
    %v1164 = vmax.f32 %v1162, %v1163
    %v1165 = vrot.slane %v1108, 4
    %v1166 = vmax.f32 %v1108, %v1165
    %v1167 = vrot.slane %v1166, 2
    %v1168 = vmax.f32 %v1166, %v1167
    %v1169 = vrot.slane %v1168, 1
    %v1170 = vmax.f32 %v1168, %v1169
    %v1171 = vrot.slane %v1109, 4
    %v1172 = vmax.f32 %v1109, %v1171
    %v1173 = vrot.slane %v1172, 2
    %v1174 = vmax.f32 %v1172, %v1173
    %v1175 = vrot.slane %v1174, 1
    %v1176 = vmax.f32 %v1174, %v1175
    %v1177 = vrot.slane %v1110, 4
    %v1178 = vmax.f32 %v1110, %v1177
    %v1179 = vrot.slane %v1178, 2
    %v1180 = vmax.f32 %v1178, %v1179
    %v1181 = vrot.slane %v1180, 1
    %v1182 = vmax.f32 %v1180, %v1181
    %v1183 = vrot.slane %v1111, 4
    %v1184 = vmax.f32 %v1111, %v1183
    %v1185 = vrot.slane %v1184, 2
    %v1186 = vmax.f32 %v1184, %v1185
    %v1187 = vrot.slane %v1186, 1
    %v1188 = vmax.f32 %v1186, %v1187
    %v1189 = vrot.slane %v1112, 4
    %v1190 = vmax.f32 %v1112, %v1189
    %v1191 = vrot.slane %v1190, 2
    %v1192 = vmax.f32 %v1190, %v1191
    %v1193 = vrot.slane %v1192, 1
    %v1194 = vmax.f32 %v1192, %v1193
    %v1195 = vrot.slane %v1113, 4
    %v1196 = vmax.f32 %v1113, %v1195
    %v1197 = vrot.slane %v1196, 2
    %v1198 = vmax.f32 %v1196, %v1197
    %v1199 = vrot.slane %v1198, 1
    %v1200 = vmax.f32 %v1198, %v1199
    %v1201 = vrot.slane %v1114, 4
    %v1202 = vmax.f32 %v1114, %v1201
    %v1203 = vrot.slane %v1202, 2
    %v1204 = vmax.f32 %v1202, %v1203
    %v1205 = vrot.slane %v1204, 1
    %v1206 = vmax.f32 %v1204, %v1205
    %v1207 = vrot.slane %v1115, 4
    %v1208 = vmax.f32 %v1115, %v1207
    %v1209 = vrot.slane %v1208, 2
    %v1210 = vmax.f32 %v1208, %v1209
    %v1211 = vrot.slane %v1210, 1
    %v1212 = vmax.f32 %v1210, %v1211
    %v1213 = vrot.slane %v1116, 4
    %v1214 = vmax.f32 %v1116, %v1213
    %v1215 = vrot.slane %v1214, 2
    %v1216 = vmax.f32 %v1214, %v1215
    %v1217 = vrot.slane %v1216, 1
    %v1218 = vmax.f32 %v1216, %v1217
    %v1219 = vrot.slane %v1117, 4
    %v1220 = vmax.f32 %v1117, %v1219
    %v1221 = vrot.slane %v1220, 2
    %v1222 = vmax.f32 %v1220, %v1221
    %v1223 = vrot.slane %v1222, 1
    %v1224 = vmax.f32 %v1222, %v1223
    %v1225 = vrot.slane %v1118, 4
    %v1226 = vmax.f32 %v1118, %v1225
    %v1227 = vrot.slane %v1226, 2
    %v1228 = vmax.f32 %v1226, %v1227
    %v1229 = vrot.slane %v1228, 1
    %v1230 = vmax.f32 %v1228, %v1229
    %v1231 = vrot.slane %v1119, 4
    %v1232 = vmax.f32 %v1119, %v1231
    %v1233 = vrot.slane %v1232, 2
    %v1234 = vmax.f32 %v1232, %v1233
    %v1235 = vrot.slane %v1234, 1
    %v1236 = vmax.f32 %v1234, %v1235
    %v1237 = vrot.slane %v1120, 4
    %v1238 = vmax.f32 %v1120, %v1237
    %v1239 = vrot.slane %v1238, 2
    %v1240 = vmax.f32 %v1238, %v1239
    %v1241 = vrot.slane %v1240, 1
    %v1242 = vmax.f32 %v1240, %v1241
    %v1243 = vrot.slane %v1121, 4
    %v1244 = vmax.f32 %v1121, %v1243
    %v1245 = vrot.slane %v1244, 2
    %v1246 = vmax.f32 %v1244, %v1245
    %v1247 = vrot.slane %v1246, 1
    %v1248 = vmax.f32 %v1246, %v1247
    %v1249 = vrot.slane %v1122, 4
    %v1250 = vmax.f32 %v1122, %v1249
    %v1251 = vrot.slane %v1250, 2
    %v1252 = vmax.f32 %v1250, %v1251
    %v1253 = vrot.slane %v1252, 1
    %v1254 = vmax.f32 %v1252, %v1253
    %v1255 = vrot.slane %v1123, 4
    %v1256 = vmax.f32 %v1123, %v1255
    %v1257 = vrot.slane %v1256, 2
    %v1258 = vmax.f32 %v1256, %v1257
    %v1259 = vrot.slane %v1258, 1
    %v1260 = vmax.f32 %v1258, %v1259
    %v1261 = vrot.slane %v1124, 4
    %v1262 = vmax.f32 %v1124, %v1261
    %v1263 = vrot.slane %v1262, 2
    %v1264 = vmax.f32 %v1262, %v1263
    %v1265 = vrot.slane %v1264, 1
    %v1266 = vmax.f32 %v1264, %v1265
    %v1267 = vrot.slane %v1125, 4
    %v1268 = vmax.f32 %v1125, %v1267
    %v1269 = vrot.slane %v1268, 2
    %v1270 = vmax.f32 %v1268, %v1269
    %v1271 = vrot.slane %v1270, 1
    %v1272 = vmax.f32 %v1270, %v1271
    %v1273 = vrot.slane %v1126, 4
    %v1274 = vmax.f32 %v1126, %v1273
    %v1275 = vrot.slane %v1274, 2
    %v1276 = vmax.f32 %v1274, %v1275
    %v1277 = vrot.slane %v1276, 1
    %v1278 = vmax.f32 %v1276, %v1277
    %v1279 = vrot.slane %v1127, 4
    %v1280 = vmax.f32 %v1127, %v1279
    %v1281 = vrot.slane %v1280, 2
    %v1282 = vmax.f32 %v1280, %v1281
    %v1283 = vrot.slane %v1282, 1
    %v1284 = vmax.f32 %v1282, %v1283
    %v1285 = vrot.slane %v1128, 4
    %v1286 = vmax.f32 %v1128, %v1285
    %v1287 = vrot.slane %v1286, 2
    %v1288 = vmax.f32 %v1286, %v1287
    %v1289 = vrot.slane %v1288, 1
    %v1290 = vmax.f32 %v1288, %v1289
    %v1291 = vrot.slane %v1129, 4
    %v1292 = vmax.f32 %v1129, %v1291
    %v1293 = vrot.slane %v1292, 2
    %v1294 = vmax.f32 %v1292, %v1293
    %v1295 = vrot.slane %v1294, 1
    %v1296 = vmax.f32 %v1294, %v1295
    %v1297 = vrot.slane %v1130, 4
    %v1298 = vmax.f32 %v1130, %v1297
    %v1299 = vrot.slane %v1298, 2
    %v1300 = vmax.f32 %v1298, %v1299
    %v1301 = vrot.slane %v1300, 1
    %v1302 = vmax.f32 %v1300, %v1301
    %v1303 = vrot.slane %v1131, 4
    %v1304 = vmax.f32 %v1131, %v1303
    %v1305 = vrot.slane %v1304, 2
    %v1306 = vmax.f32 %v1304, %v1305
    %v1307 = vrot.slane %v1306, 1
    %v1308 = vmax.f32 %v1306, %v1307
    %v1309 = vrot.slane %v1132, 4
    %v1310 = vmax.f32 %v1132, %v1309
    %v1311 = vrot.slane %v1310, 2
    %v1312 = vmax.f32 %v1310, %v1311
    %v1313 = vrot.slane %v1312, 1
    %v1314 = vmax.f32 %v1312, %v1313
    %v1315 = vrot.slane %v1133, 4
    %v1316 = vmax.f32 %v1133, %v1315
    %v1317 = vrot.slane %v1316, 2
    %v1318 = vmax.f32 %v1316, %v1317
    %v1319 = vrot.slane %v1318, 1
    %v1320 = vmax.f32 %v1318, %v1319
    %v1321 = vrot.slane %v1134, 4
    %v1322 = vmax.f32 %v1134, %v1321
    %v1323 = vrot.slane %v1322, 2
    %v1324 = vmax.f32 %v1322, %v1323
    %v1325 = vrot.slane %v1324, 1
    %v1326 = vmax.f32 %v1324, %v1325
    %v1327 = vld [vmem:[%s8] sm:$0xf]
    %1329 = vset.pattern.permute.xlu0 0
    %1330 = vperm.xlu0 %1329, %v1327
    %v1331 = vpop.permute.xlu0 %1330
    %v1332 = vrot.slane %v1331, 1
    %v1333 = vrot.slane %v1331, 2
    %v1334 = vrot.slane %v1331, 3
    %v1339 = vmul.f32 %v504, %v1331
    %v1340 = vmul.f32 %v510, %v1332
    %v1341 = vmul.f32 %v516, %v1333
    %v1342 = vmul.f32 %v522, %v1334
    %v1343 = vmul.f32 %v528, %v1331
    %v1344 = vmul.f32 %v534, %v1332
    %v1345 = vmul.f32 %v540, %v1333
    %v1346 = vmul.f32 %v546, %v1334
    %v1347 = vmul.f32 %v552, %v1331
    %v1348 = vmul.f32 %v558, %v1332
    %v1349 = vmul.f32 %v564, %v1333
    %v1350 = vmul.f32 %v570, %v1334
    %v1351 = vmul.f32 %v576, %v1331
    %v1352 = vmul.f32 %v582, %v1332
    %v1353 = vmul.f32 %v588, %v1333
    %v1354 = vmul.f32 %v594, %v1334
    %v1355 = vmul.f32 %v600, %v1331
    %v1356 = vmul.f32 %v606, %v1332
    %v1357 = vmul.f32 %v612, %v1333
    %v1358 = vmul.f32 %v618, %v1334
    %v1359 = vmul.f32 %v624, %v1331
    %v1360 = vmul.f32 %v630, %v1332
    %v1361 = vmul.f32 %v636, %v1333
    %v1362 = vmul.f32 %v642, %v1334
    %v1363 = vmul.f32 %v648, %v1331
    %v1364 = vmul.f32 %v654, %v1332
    %v1365 = vmul.f32 %v660, %v1333
    %v1366 = vmul.f32 %v666, %v1334
    %v1367 = vmul.f32 %v672, %v1331
    %v1368 = vmul.f32 %v678, %v1332
    %v1369 = vmul.f32 %v684, %v1333
    %v1370 = vmul.f32 %v690, %v1334
    %v1403 = vrot.slane %v1340, 7
    %vm1404 = vcmask 1041409
    %v1405 = vsel %vm1404, %v1403, %v1339
    %v1406 = vrot.slane %v1341, 6
    %vm1407 = vcmask 1042434
    %v1408 = vsel %vm1407, %v1406, %v1405
    %v1409 = vrot.slane %v1342, 5
    %vm1410 = vcmask 1043459
    %v1411 = vsel %vm1410, %v1409, %v1408
    %v1412 = vrot.slane %v1344, 7
    %v1413 = vsel %vm1404, %v1412, %v1343
    %v1414 = vrot.slane %v1345, 6
    %v1415 = vsel %vm1407, %v1414, %v1413
    %v1416 = vrot.slane %v1346, 5
    %v1417 = vsel %vm1410, %v1416, %v1415
    %v1418 = vrot.slane %v1348, 7
    %v1419 = vsel %vm1404, %v1418, %v1347
    %v1420 = vrot.slane %v1349, 6
    %v1421 = vsel %vm1407, %v1420, %v1419
    %v1422 = vrot.slane %v1350, 5
    %v1423 = vsel %vm1410, %v1422, %v1421
    %v1424 = vrot.slane %v1352, 7
    %v1425 = vsel %vm1404, %v1424, %v1351
    %v1426 = vrot.slane %v1353, 6
    %v1427 = vsel %vm1407, %v1426, %v1425
    %v1428 = vrot.slane %v1354, 5
    %v1429 = vsel %vm1410, %v1428, %v1427
    %v1430 = vrot.slane %v1356, 7
    %v1431 = vsel %vm1404, %v1430, %v1355
    %v1432 = vrot.slane %v1357, 6
    %v1433 = vsel %vm1407, %v1432, %v1431
    %v1434 = vrot.slane %v1358, 5
    %v1435 = vsel %vm1410, %v1434, %v1433
    %v1436 = vrot.slane %v1360, 7
    %v1437 = vsel %vm1404, %v1436, %v1359
    %v1438 = vrot.slane %v1361, 6
    %v1439 = vsel %vm1407, %v1438, %v1437
    %v1440 = vrot.slane %v1362, 5
    %v1441 = vsel %vm1410, %v1440, %v1439
    %v1442 = vrot.slane %v1364, 7
    %v1443 = vsel %vm1404, %v1442, %v1363
    %v1444 = vrot.slane %v1365, 6
    %v1445 = vsel %vm1407, %v1444, %v1443
    %v1446 = vrot.slane %v1366, 5
    %v1447 = vsel %vm1410, %v1446, %v1445
    %v1448 = vrot.slane %v1368, 7
    %v1449 = vsel %vm1404, %v1448, %v1367
    %v1450 = vrot.slane %v1369, 6
    %v1451 = vsel %vm1407, %v1450, %v1449
    %v1452 = vrot.slane %v1370, 5
    %v1453 = vsel %vm1410, %v1452, %v1451
    %vm1462 = vcmask 1043456
    %v1463 = vsel %vm1462, %v1411, 0.0
    %v1464 = vrot.slane %v1463, 4
    %v1465 = vadd.f32 %v1463, %v1464
    %v1466 = vrot.slane %v1465, 2
    %v1467 = vadd.f32 %v1465, %v1466
    %v1468 = vrot.slane %v1467, 1
    %v1469 = vadd.f32 %v1467, %v1468
    %v1470 = vsel %vm1462, %v1417, 0.0
    %v1471 = vrot.slane %v1470, 4
    %v1472 = vadd.f32 %v1470, %v1471
    %v1473 = vrot.slane %v1472, 2
    %v1474 = vadd.f32 %v1472, %v1473
    %v1475 = vrot.slane %v1474, 1
    %v1476 = vadd.f32 %v1474, %v1475
    %v1477 = vsel %vm1462, %v1423, 0.0
    %v1478 = vrot.slane %v1477, 4
    %v1479 = vadd.f32 %v1477, %v1478
    %v1480 = vrot.slane %v1479, 2
    %v1481 = vadd.f32 %v1479, %v1480
    %v1482 = vrot.slane %v1481, 1
    %v1483 = vadd.f32 %v1481, %v1482
    %v1484 = vsel %vm1462, %v1429, 0.0
    %v1485 = vrot.slane %v1484, 4
    %v1486 = vadd.f32 %v1484, %v1485
    %v1487 = vrot.slane %v1486, 2
    %v1488 = vadd.f32 %v1486, %v1487
    %v1489 = vrot.slane %v1488, 1
    %v1490 = vadd.f32 %v1488, %v1489
    %v1491 = vsel %vm1462, %v1435, 0.0
    %v1492 = vrot.slane %v1491, 4
    %v1493 = vadd.f32 %v1491, %v1492
    %v1494 = vrot.slane %v1493, 2
    %v1495 = vadd.f32 %v1493, %v1494
    %v1496 = vrot.slane %v1495, 1
    %v1497 = vadd.f32 %v1495, %v1496
    %v1498 = vsel %vm1462, %v1441, 0.0
    %v1499 = vrot.slane %v1498, 4
    %v1500 = vadd.f32 %v1498, %v1499
    %v1501 = vrot.slane %v1500, 2
    %v1502 = vadd.f32 %v1500, %v1501
    %v1503 = vrot.slane %v1502, 1
    %v1504 = vadd.f32 %v1502, %v1503
    %v1505 = vsel %vm1462, %v1447, 0.0
    %v1506 = vrot.slane %v1505, 4
    %v1507 = vadd.f32 %v1505, %v1506
    %v1508 = vrot.slane %v1507, 2
    %v1509 = vadd.f32 %v1507, %v1508
    %v1510 = vrot.slane %v1509, 1
    %v1511 = vadd.f32 %v1509, %v1510
    %v1512 = vsel %vm1462, %v1453, 0.0
    %v1513 = vrot.slane %v1512, 4
    %v1514 = vadd.f32 %v1512, %v1513
    %v1515 = vrot.slane %v1514, 2
    %v1516 = vadd.f32 %v1514, %v1515
    %v1517 = vrot.slane %v1516, 1
    %v1518 = vadd.f32 %v1516, %v1517
    %v1519 = vmul.f32 %v1140, %v1331
    %v1520 = vmul.f32 %v1146, %v1332
    %v1521 = vmul.f32 %v1152, %v1333
    %v1522 = vmul.f32 %v1158, %v1334
    %v1523 = vmul.f32 %v1164, %v1331
    %v1524 = vmul.f32 %v1170, %v1332
    %v1525 = vmul.f32 %v1176, %v1333
    %v1526 = vmul.f32 %v1182, %v1334
    %v1527 = vmul.f32 %v1188, %v1331
    %v1528 = vmul.f32 %v1194, %v1332
    %v1529 = vmul.f32 %v1200, %v1333
    %v1530 = vmul.f32 %v1206, %v1334
    %v1531 = vmul.f32 %v1212, %v1331
    %v1532 = vmul.f32 %v1218, %v1332
    %v1533 = vmul.f32 %v1224, %v1333
    %v1534 = vmul.f32 %v1230, %v1334
    %v1535 = vmul.f32 %v1236, %v1331
    %v1536 = vmul.f32 %v1242, %v1332
    %v1537 = vmul.f32 %v1248, %v1333
    %v1538 = vmul.f32 %v1254, %v1334
    %v1539 = vmul.f32 %v1260, %v1331
    %v1540 = vmul.f32 %v1266, %v1332
    %v1541 = vmul.f32 %v1272, %v1333
    %v1542 = vmul.f32 %v1278, %v1334
    %v1543 = vmul.f32 %v1284, %v1331
    %v1544 = vmul.f32 %v1290, %v1332
    %v1545 = vmul.f32 %v1296, %v1333
    %v1546 = vmul.f32 %v1302, %v1334
    %v1547 = vmul.f32 %v1308, %v1331
    %v1548 = vmul.f32 %v1314, %v1332
    %v1549 = vmul.f32 %v1320, %v1333
    %v1550 = vmul.f32 %v1326, %v1334
    %v1583 = vrot.slane %v1520, 7
    %v1584 = vsel %vm1404, %v1583, %v1519
    %v1585 = vrot.slane %v1521, 6
    %v1586 = vsel %vm1407, %v1585, %v1584
    %v1587 = vrot.slane %v1522, 5
    %v1588 = vsel %vm1410, %v1587, %v1586
    %v1589 = vrot.slane %v1524, 7
    %v1590 = vsel %vm1404, %v1589, %v1523
    %v1591 = vrot.slane %v1525, 6
    %v1592 = vsel %vm1407, %v1591, %v1590
    %v1593 = vrot.slane %v1526, 5
    %v1594 = vsel %vm1410, %v1593, %v1592
    %v1595 = vrot.slane %v1528, 7
    %v1596 = vsel %vm1404, %v1595, %v1527
    %v1597 = vrot.slane %v1529, 6
    %v1598 = vsel %vm1407, %v1597, %v1596
    %v1599 = vrot.slane %v1530, 5
    %v1600 = vsel %vm1410, %v1599, %v1598
    %v1601 = vrot.slane %v1532, 7
    %v1602 = vsel %vm1404, %v1601, %v1531
    %v1603 = vrot.slane %v1533, 6
    %v1604 = vsel %vm1407, %v1603, %v1602
    %v1605 = vrot.slane %v1534, 5
    %v1606 = vsel %vm1410, %v1605, %v1604
    %v1607 = vrot.slane %v1536, 7
    %v1608 = vsel %vm1404, %v1607, %v1535
    %v1609 = vrot.slane %v1537, 6
    %v1610 = vsel %vm1407, %v1609, %v1608
    %v1611 = vrot.slane %v1538, 5
    %v1612 = vsel %vm1410, %v1611, %v1610
    %v1613 = vrot.slane %v1540, 7
    %v1614 = vsel %vm1404, %v1613, %v1539
    %v1615 = vrot.slane %v1541, 6
    %v1616 = vsel %vm1407, %v1615, %v1614
    %v1617 = vrot.slane %v1542, 5
    %v1618 = vsel %vm1410, %v1617, %v1616
    %v1619 = vrot.slane %v1544, 7
    %v1620 = vsel %vm1404, %v1619, %v1543
    %v1621 = vrot.slane %v1545, 6
    %v1622 = vsel %vm1407, %v1621, %v1620
    %v1623 = vrot.slane %v1546, 5
    %v1624 = vsel %vm1410, %v1623, %v1622
    %v1625 = vrot.slane %v1548, 7
    %v1626 = vsel %vm1404, %v1625, %v1547
    %v1627 = vrot.slane %v1549, 6
    %v1628 = vsel %vm1407, %v1627, %v1626
    %v1629 = vrot.slane %v1550, 5
    %v1630 = vsel %vm1410, %v1629, %v1628
    %v1639 = vsel %vm1462, %v1588, 0.0
    %v1640 = vrot.slane %v1639, 4
    %v1641 = vadd.f32 %v1639, %v1640
    %v1642 = vrot.slane %v1641, 2
    %v1643 = vadd.f32 %v1641, %v1642
    %v1644 = vrot.slane %v1643, 1
    %v1645 = vadd.f32 %v1643, %v1644
    %v1646 = vsel %vm1462, %v1594, 0.0
    %v1647 = vrot.slane %v1646, 4
    %v1648 = vadd.f32 %v1646, %v1647
    %v1649 = vrot.slane %v1648, 2
    %v1650 = vadd.f32 %v1648, %v1649
    %v1651 = vrot.slane %v1650, 1
    %v1652 = vadd.f32 %v1650, %v1651
    %v1653 = vsel %vm1462, %v1600, 0.0
    %v1654 = vrot.slane %v1653, 4
    %v1655 = vadd.f32 %v1653, %v1654
    %v1656 = vrot.slane %v1655, 2
    %v1657 = vadd.f32 %v1655, %v1656
    %v1658 = vrot.slane %v1657, 1
    %v1659 = vadd.f32 %v1657, %v1658
    %v1660 = vsel %vm1462, %v1606, 0.0
    %v1661 = vrot.slane %v1660, 4
    %v1662 = vadd.f32 %v1660, %v1661
    %v1663 = vrot.slane %v1662, 2
    %v1664 = vadd.f32 %v1662, %v1663
    %v1665 = vrot.slane %v1664, 1
    %v1666 = vadd.f32 %v1664, %v1665
    %v1667 = vsel %vm1462, %v1612, 0.0
    %v1668 = vrot.slane %v1667, 4
    %v1669 = vadd.f32 %v1667, %v1668
    %v1670 = vrot.slane %v1669, 2
    %v1671 = vadd.f32 %v1669, %v1670
    %v1672 = vrot.slane %v1671, 1
    %v1673 = vadd.f32 %v1671, %v1672
    %v1674 = vsel %vm1462, %v1618, 0.0
    %v1675 = vrot.slane %v1674, 4
    %v1676 = vadd.f32 %v1674, %v1675
    %v1677 = vrot.slane %v1676, 2
    %v1678 = vadd.f32 %v1676, %v1677
    %v1679 = vrot.slane %v1678, 1
    %v1680 = vadd.f32 %v1678, %v1679
    %v1681 = vsel %vm1462, %v1624, 0.0
    %v1682 = vrot.slane %v1681, 4
    %v1683 = vadd.f32 %v1681, %v1682
    %v1684 = vrot.slane %v1683, 2
    %v1685 = vadd.f32 %v1683, %v1684
    %v1686 = vrot.slane %v1685, 1
    %v1687 = vadd.f32 %v1685, %v1686
    %v1688 = vsel %vm1462, %v1630, 0.0
    %v1689 = vrot.slane %v1688, 4
    %v1690 = vadd.f32 %v1688, %v1689
    %v1691 = vrot.slane %v1690, 2
    %v1692 = vadd.f32 %v1690, %v1691
    %v1693 = vrot.slane %v1692, 1
    %v1694 = vadd.f32 %v1692, %v1693
    %v1695 = vld [vmem:[%s9] sm:$0xff]
    %v1696 = vld [vmem:[%s9 + $0x8] sm:$0xff]
    %v1697 = vld [vmem:[%s9 + $0x10] sm:$0xff]
    %v1698 = vld [vmem:[%s9 + $0x18] sm:$0xff]
    %v1699 = vld [vmem:[%s9 + $0x20] sm:$0xff]
    %v1700 = vld [vmem:[%s9 + $0x28] sm:$0xff]
    %v1701 = vld [vmem:[%s9 + $0x30] sm:$0xff]
    %v1702 = vld [vmem:[%s9 + $0x38] sm:$0xff]
    %v1703 = vld [vmem:[%s9 + $0x40] sm:$0xff]
    %v1704 = vld [vmem:[%s9 + $0x48] sm:$0xff]
    %v1705 = vld [vmem:[%s9 + $0x50] sm:$0xff]
    %v1706 = vld [vmem:[%s9 + $0x58] sm:$0xff]
    %v1707 = vld [vmem:[%s9 + $0x60] sm:$0xff]
    %v1708 = vld [vmem:[%s9 + $0x68] sm:$0xff]
    %v1709 = vld [vmem:[%s9 + $0x70] sm:$0xff]
    %v1710 = vld [vmem:[%s9 + $0x78] sm:$0xff]
    %v1711 = vld [vmem:[%s10] sm:$0xff]
    %v1712 = vld [vmem:[%s10 + $0x8] sm:$0xff]
    %v1713 = vld [vmem:[%s10 + $0x10] sm:$0xff]
    %v1714 = vld [vmem:[%s10 + $0x18] sm:$0xff]
    %v1715 = vld [vmem:[%s10 + $0x20] sm:$0xff]
    %v1716 = vld [vmem:[%s10 + $0x28] sm:$0xff]
    %v1717 = vld [vmem:[%s10 + $0x30] sm:$0xff]
    %v1718 = vld [vmem:[%s10 + $0x38] sm:$0xff]
    %v1719 = vld [vmem:[%s10 + $0x40] sm:$0xff]
    %v1720 = vld [vmem:[%s10 + $0x48] sm:$0xff]
    %v1721 = vld [vmem:[%s10 + $0x50] sm:$0xff]
    %v1722 = vld [vmem:[%s10 + $0x58] sm:$0xff]
    %v1723 = vld [vmem:[%s10 + $0x60] sm:$0xff]
    %v1724 = vld [vmem:[%s10 + $0x68] sm:$0xff]
    %v1725 = vld [vmem:[%s10 + $0x70] sm:$0xff]
    %v1726 = vld [vmem:[%s10 + $0x78] sm:$0xff]
    %v1735 = vrot.slane %v1652, 7
    %v1736 = vsel %vm1404, %v1735, %v1645
    %v1737 = vrot.slane %v1659, 6
    %v1738 = vsel %vm1407, %v1737, %v1736
    %v1739 = vrot.slane %v1666, 5
    %v1740 = vsel %vm1410, %v1739, %v1738
    %v1741 = vrot.slane %v1673, 4
    %vm1742 = vcmask 1044484
    %v1743 = vsel %vm1742, %v1741, %v1740
    %v1744 = vrot.slane %v1680, 3
    %vm1745 = vcmask 1045509
    %v1746 = vsel %vm1745, %v1744, %v1743
    %v1747 = vrot.slane %v1687, 2
    %vm1748 = vcmask 1046534
    %v1749 = vsel %vm1748, %v1747, %v1746
    %v1750 = vrot.slane %v1694, 1
    %vm1751 = vcmask 1047559
    %v1752 = vsel %vm1751, %v1750, %v1749
    %1754 = vmatprep.subr.mxu0 0.0
    %1755 = vmatpush1.msra.mxu0 %v1726
    %1756 = vmatprep.subr.mxu0 0.0
    %1757 = vmatpush1.msra.mxu0 %v1725
    %1758 = vmatprep.subr.mxu0 0.0
    %1759 = vmatpush1.msra.mxu0 %v1724
    %1760 = vmatprep.subr.mxu0 0.0
    %1761 = vmatpush1.msra.mxu0 %v1723
    %1762 = vmatprep.subr.mxu0 0.0
    %1763 = vmatpush1.msra.mxu0 %v1722
    %1764 = vmatprep.subr.mxu0 0.0
    %1765 = vmatpush1.msra.mxu0 %v1721
    %1766 = vmatprep.subr.mxu0 0.0
    %1767 = vmatpush1.msra.mxu0 %v1720
    %1768 = vmatprep.subr.mxu0 0.0
    %1769 = vmatpush1.msra.mxu0 %v1719
    %1770 = vmatprep.subr.mxu0 0.0
    %1771 = vmatpush1.msra.mxu0 %v1718
    %1772 = vmatprep.subr.mxu0 0.0
    %1773 = vmatpush1.msra.mxu0 %v1717
    %1774 = vmatprep.subr.mxu0 0.0
    %1775 = vmatpush1.msra.mxu0 %v1716
    %1776 = vmatprep.subr.mxu0 0.0
    %1777 = vmatpush1.msra.mxu0 %v1715
    %1778 = vmatprep.subr.mxu0 0.0
    %1779 = vmatpush1.msra.mxu0 %v1714
    %1780 = vmatprep.subr.mxu0 0.0
    %1781 = vmatpush1.msra.mxu0 %v1713
    %1782 = vmatprep.subr.mxu0 0.0
    %1783 = vmatpush1.msra.mxu0 %v1712
    %1784 = vmatprep.subr.mxu0 0.0
    %1785 = vmatpush1.msra.mxu0 %v1711
    %1786 = vmatprep.subr.mxu0 0.0
    %1787 = vmatpush2.msra.mxu0 0.0
    %1788 = vmatprep.subr.mxu0 0.0
    %1789 = vmatpush2.msra.mxu0 0.0
    %1790 = vmatprep.subr.mxu0 0.0
    %1791 = vmatpush2.msra.mxu0 0.0
    %1792 = vmatprep.subr.mxu0 0.0
    %1793 = vmatpush2.msra.mxu0 0.0
    %1794 = vmatprep.subr.mxu0 0.0
    %1795 = vmatpush2.msra.mxu0 0.0
    %1796 = vmatprep.subr.mxu0 0.0
    %1797 = vmatpush2.msra.mxu0 0.0
    %1798 = vmatprep.subr.mxu0 0.0
    %1799 = vmatpush2.msra.mxu0 0.0
    %1800 = vmatprep.subr.mxu0 0.0
    %1801 = vmatpush2.msra.mxu0 0.0
    %1802 = vmatprep.subr.mxu0 0.0
    %1803 = vmatpush2.msra.mxu0 0.0
    %1804 = vmatprep.subr.mxu0 0.0
    %1805 = vmatpush2.msra.mxu0 0.0
    %1806 = vmatprep.subr.mxu0 0.0
    %1807 = vmatpush2.msra.mxu0 0.0
    %1808 = vmatprep.subr.mxu0 0.0
    %1809 = vmatpush2.msra.mxu0 0.0
    %1810 = vmatprep.subr.mxu0 0.0
    %1811 = vmatpush2.msra.mxu0 0.0
    %1812 = vmatprep.subr.mxu0 0.0
    %1813 = vmatpush2.msra.mxu0 0.0
    %1814 = vmatprep.subr.mxu0 0.0
    %1815 = vmatpush2.msra.mxu0 0.0
    %1816 = vmatprep.subr.mxu0 0.0
    %1817 = vmatpush2.msra.mxu0 0.0
    %1818 = vmatprep.mubr.f32.mxu0 0.0
    %1819 = vmatmul.mubr.f32.gmra.mxu0 %v1752
    %v1820 = vpop.f32.mrf.mxu0
    %v1821 = vadd.f32 0.0, %v1820
    %v1822 = vpop.f32.mrf.mxu0
    %1823 = vdwg.mxu0
    %v1832 = vrot.slane %v1476, 7
    %v1833 = vsel %vm1404, %v1832, %v1469
    %v1834 = vrot.slane %v1483, 6
    %v1835 = vsel %vm1407, %v1834, %v1833
    %v1836 = vrot.slane %v1490, 5
    %v1837 = vsel %vm1410, %v1836, %v1835
    %v1838 = vrot.slane %v1497, 4
    %v1839 = vsel %vm1742, %v1838, %v1837
    %v1840 = vrot.slane %v1504, 3
    %v1841 = vsel %vm1745, %v1840, %v1839
    %v1842 = vrot.slane %v1511, 2
    %v1843 = vsel %vm1748, %v1842, %v1841
    %v1844 = vrot.slane %v1518, 1
    %v1845 = vsel %vm1751, %v1844, %v1843
    %1847 = vmatprep.subr.mxu0 0.0
    %1848 = vmatpush1.msra.mxu0 %v1710
    %1849 = vmatprep.subr.mxu0 0.0
    %1850 = vmatpush1.msra.mxu0 %v1709
    %1851 = vmatprep.subr.mxu0 0.0
    %1852 = vmatpush1.msra.mxu0 %v1708
    %1853 = vmatprep.subr.mxu0 0.0
    %1854 = vmatpush1.msra.mxu0 %v1707
    %1855 = vmatprep.subr.mxu0 0.0
    %1856 = vmatpush1.msra.mxu0 %v1706
    %1857 = vmatprep.subr.mxu0 0.0
    %1858 = vmatpush1.msra.mxu0 %v1705
    %1859 = vmatprep.subr.mxu0 0.0
    %1860 = vmatpush1.msra.mxu0 %v1704
    %1861 = vmatprep.subr.mxu0 0.0
    %1862 = vmatpush1.msra.mxu0 %v1703
    %1863 = vmatprep.subr.mxu0 0.0
    %1864 = vmatpush1.msra.mxu0 %v1702
    %1865 = vmatprep.subr.mxu0 0.0
    %1866 = vmatpush1.msra.mxu0 %v1701
    %1867 = vmatprep.subr.mxu0 0.0
    %1868 = vmatpush1.msra.mxu0 %v1700
    %1869 = vmatprep.subr.mxu0 0.0
    %1870 = vmatpush1.msra.mxu0 %v1699
    %1871 = vmatprep.subr.mxu0 0.0
    %1872 = vmatpush1.msra.mxu0 %v1698
    %1873 = vmatprep.subr.mxu0 0.0
    %1874 = vmatpush1.msra.mxu0 %v1697
    %1875 = vmatprep.subr.mxu0 0.0
    %1876 = vmatpush1.msra.mxu0 %v1696
    %1877 = vmatprep.subr.mxu0 0.0
    %1878 = vmatpush1.msra.mxu0 %v1695
    %1879 = vmatprep.subr.mxu0 0.0
    %1880 = vmatpush2.msra.mxu0 0.0
    %1881 = vmatprep.subr.mxu0 0.0
    %1882 = vmatpush2.msra.mxu0 0.0
    %1883 = vmatprep.subr.mxu0 0.0
    %1884 = vmatpush2.msra.mxu0 0.0
    %1885 = vmatprep.subr.mxu0 0.0
    %1886 = vmatpush2.msra.mxu0 0.0
    %1887 = vmatprep.subr.mxu0 0.0
    %1888 = vmatpush2.msra.mxu0 0.0
    %1889 = vmatprep.subr.mxu0 0.0
    %1890 = vmatpush2.msra.mxu0 0.0
    %1891 = vmatprep.subr.mxu0 0.0
    %1892 = vmatpush2.msra.mxu0 0.0
    %1893 = vmatprep.subr.mxu0 0.0
    %1894 = vmatpush2.msra.mxu0 0.0
    %1895 = vmatprep.subr.mxu0 0.0
    %1896 = vmatpush2.msra.mxu0 0.0
    %1897 = vmatprep.subr.mxu0 0.0
    %1898 = vmatpush2.msra.mxu0 0.0
    %1899 = vmatprep.subr.mxu0 0.0
    %1900 = vmatpush2.msra.mxu0 0.0
    %1901 = vmatprep.subr.mxu0 0.0
    %1902 = vmatpush2.msra.mxu0 0.0
    %1903 = vmatprep.subr.mxu0 0.0
    %1904 = vmatpush2.msra.mxu0 0.0
    %1905 = vmatprep.subr.mxu0 0.0
    %1906 = vmatpush2.msra.mxu0 0.0
    %1907 = vmatprep.subr.mxu0 0.0
    %1908 = vmatpush2.msra.mxu0 0.0
    %1909 = vmatprep.subr.mxu0 0.0
    %1910 = vmatpush2.msra.mxu0 0.0
    %1911 = vmatprep.mubr.f32.mxu0 0.0
    %1912 = vmatmul.mubr.f32.gmra.mxu0 %v1845
    %v1913 = vpop.f32.mrf.mxu0
    %v1914 = vadd.f32 %v1821, %v1913
    %v1915 = vpop.f32.mrf.mxu0
    %1916 = vdwg.mxu0
    %v1917 = vld [vmem:[%s11] sm:$0x1]
    %v1919 = vlaneseq
    %v1920 = vshrl.u32 %v1919, 7
    %v1921 = vsub.s32 0, %v1920
    %v1922 = vrot.slane %v1917, %v1921
    %v1924 = vadd.f32 %v1914, %v1922
    %v1925 = vtanh.pop %v1924
    %v1926 = vsel %vm97, %v1925, 0.0
    %1927 = vadd.xlane.f32.xlu0 %v1926
    %v1928 = vpop.xlane.xlu0 %1927
    %v1929 = vrcp.pop 32.0
    %v1930 = vmul.f32 %v1928, %v1929
    %v1931 = vsub.f32 %v1925, %v1930
    %v1932 = vmul.f32 %v1931, %v1931
    %v1933 = vsel %vm97, %v1932, 0.0
    %1934 = vadd.xlane.f32.xlu0 %v1933
    %v1935 = vpop.xlane.xlu0 %1934
    %v1936 = vmul.f32 %v1935, %v1929
    %v1937 = vadd.f32 %v1936, 1e-05
    %v1938 = vrsqrt.pop %v1937
    %v1939 = vmul.f32 %v1931, %v1938
    %v1940 = vld [vmem:[%s12] sm:$0x1]
    %v1942 = vlaneseq
    %v1943 = vshrl.u32 %v1942, 7
    %v1944 = vsub.s32 0, %v1943
    %v1945 = vrot.slane %v1940, %v1944
    %v1947 = vmul.f32 %v1939, %v1945
    %v1948 = vld [vmem:[%s13] sm:$0x1]
    %v1950 = vlaneseq
    %v1951 = vshrl.u32 %v1950, 7
    %v1952 = vsub.s32 0, %v1951
    %v1953 = vrot.slane %v1948, %v1952
    %v1955 = vadd.f32 %v1947, %v1953
    %v1956 = vld [vmem:[%s14] sm:$0xff]
    %v1957 = vld [vmem:[%s14 + $0x8] sm:$0xff]
    %v1958 = vld [vmem:[%s14 + $0x10] sm:$0xff]
    %v1959 = vld [vmem:[%s14 + $0x18] sm:$0xff]
    %v1960 = vld [vmem:[%s15] sm:$0x1]
    %v1962 = vlaneseq
    %v1963 = vshrl.u32 %v1962, 7
    %v1964 = vsub.s32 0, %v1963
    %v1965 = vrot.slane %v1960, %v1964
    %v1968 = vsel %vm97, %v1955, 0
    %1970 = vmatprep.subr.mxu0 0.0
    %1971 = vmatpush1.msra.mxu0 0.0
    %1972 = vmatprep.subr.mxu0 0.0
    %1973 = vmatpush1.msra.mxu0 0.0
    %1974 = vmatprep.subr.mxu0 0.0
    %1975 = vmatpush1.msra.mxu0 0.0
    %1976 = vmatprep.subr.mxu0 0.0
    %1977 = vmatpush1.msra.mxu0 0.0
    %1978 = vmatprep.subr.mxu0 0.0
    %1979 = vmatpush1.msra.mxu0 0.0
    %1980 = vmatprep.subr.mxu0 0.0
    %1981 = vmatpush1.msra.mxu0 0.0
    %1982 = vmatprep.subr.mxu0 0.0
    %1983 = vmatpush1.msra.mxu0 0.0
    %1984 = vmatprep.subr.mxu0 0.0
    %1985 = vmatpush1.msra.mxu0 0.0
    %1986 = vmatprep.subr.mxu0 0.0
    %1987 = vmatpush1.msra.mxu0 0.0
    %1988 = vmatprep.subr.mxu0 0.0
    %1989 = vmatpush1.msra.mxu0 0.0
    %1990 = vmatprep.subr.mxu0 0.0
    %1991 = vmatpush1.msra.mxu0 0.0
    %1992 = vmatprep.subr.mxu0 0.0
    %1993 = vmatpush1.msra.mxu0 0.0
    %1994 = vmatprep.subr.mxu0 0.0
    %1995 = vmatpush1.msra.mxu0 %v1959
    %1996 = vmatprep.subr.mxu0 0.0
    %1997 = vmatpush1.msra.mxu0 %v1958
    %1998 = vmatprep.subr.mxu0 0.0
    %1999 = vmatpush1.msra.mxu0 %v1957
    %2000 = vmatprep.subr.mxu0 0.0
    %2001 = vmatpush1.msra.mxu0 %v1956
    %2002 = vmatprep.subr.mxu0 0.0
    %2003 = vmatpush2.msra.mxu0 0.0
    %2004 = vmatprep.subr.mxu0 0.0
    %2005 = vmatpush2.msra.mxu0 0.0
    %2006 = vmatprep.subr.mxu0 0.0
    %2007 = vmatpush2.msra.mxu0 0.0
    %2008 = vmatprep.subr.mxu0 0.0
    %2009 = vmatpush2.msra.mxu0 0.0
    %2010 = vmatprep.subr.mxu0 0.0
    %2011 = vmatpush2.msra.mxu0 0.0
    %2012 = vmatprep.subr.mxu0 0.0
    %2013 = vmatpush2.msra.mxu0 0.0
    %2014 = vmatprep.subr.mxu0 0.0
    %2015 = vmatpush2.msra.mxu0 0.0
    %2016 = vmatprep.subr.mxu0 0.0
    %2017 = vmatpush2.msra.mxu0 0.0
    %2018 = vmatprep.subr.mxu0 0.0
    %2019 = vmatpush2.msra.mxu0 0.0
    %2020 = vmatprep.subr.mxu0 0.0
    %2021 = vmatpush2.msra.mxu0 0.0
    %2022 = vmatprep.subr.mxu0 0.0
    %2023 = vmatpush2.msra.mxu0 0.0
    %2024 = vmatprep.subr.mxu0 0.0
    %2025 = vmatpush2.msra.mxu0 0.0
    %2026 = vmatprep.subr.mxu0 0.0
    %2027 = vmatpush2.msra.mxu0 0.0
    %2028 = vmatprep.subr.mxu0 0.0
    %2029 = vmatpush2.msra.mxu0 0.0
    %2030 = vmatprep.subr.mxu0 0.0
    %2031 = vmatpush2.msra.mxu0 0.0
    %2032 = vmatprep.subr.mxu0 0.0
    %2033 = vmatpush2.msra.mxu0 0.0
    %2034 = vmatprep.mubr.f32.mxu0 0.0
    %2035 = vmatmul.mubr.f32.gmra.mxu0 %v1968
    %v2036 = vpop.f32.mrf.mxu0
    %v2037 = vadd.f32 %v1965, %v2036
    %v2038 = vpop.f32.mrf.mxu0
    %2039 = vdwg.mxu0
    %v2040 = vxor.u32 %v2037, 2147483648
    %v2041 = vmul.f32 %v2040, 1.442695
    %v2042 = vpow.pop %v2041
    %v2043 = vadd.f32 %v2042, 1.0
    %v2044 = vrcp.pop %v2043
    %v2045 = vmul.f32 1.0, %v2044
    %2046 = vst [vmem:[#allocation2] sm:$0xff] %v2045
    // Predicated region
    $region66: #{tpu_custom_call.1} parent=1 // pred_check
      _
    $region67: #{tpu_custom_call.1} parent=1 // pred_check_branch
      %2048 = sbr.rel (0) target = $region69
    $region68: #{tpu_custom_call.1} parent=1 // pred_region
      %s2050 = ssub.s32 128, 128
      %2051 = vsyncadd [#allocation3], %s2050
      %s2053 = sshll.u32 [#allocation2], 4
      %s2054 = int_to_ptr.vmem [resolvable:$true] %s2053
      %2056 = dma.vmem_to_hbm [thread:$0]  %s2054, 128, %s16, [#allocation3]
    $region69: #{tpu_custom_call.1} parent=1 // pred_fallthru
      _
    // Predicated region
    $region70: #{tpu_custom_call.1} parent=1 // pred_check
      _
    $region71: #{tpu_custom_call.1} parent=1 // pred_check_branch
      %2058 = sbr.rel (0) target = $region73
    $region72: #{tpu_custom_call.1} parent=1 // pred_region
      %2059 = dma.done [#allocation3], 128
    $region73: #{tpu_custom_call.1} parent=1 // pred_fallthru
      _
    %2060 = vsyncpa [#allocation3], 1

</llo_original>
